<compile_context>
chip_gen: v5e
topology: v5e:2x2
jax: 0.10.0
libtpu: 0.0.40
codegen_flags: <defaults>
</compile_context>

<pallas_src>
import math

import jax
import jax.numpy as jnp
import numpy as np
from jax import lax
from jax.experimental import pallas as pl
from jax.experimental.pallas import tpu as pltpu

_CHUNK = 8  # time steps per unrolled scan chunk (one f32 sublane tile)


def _mamba_kernel(x_ref, w_in_x_ref, w_in_z_ref, conv_w_ref, conv_b_ref,
                  w_x_dt_ref, w_x_b_ref, w_x_c_ref, w_dt_ref, b_dt_ref,
                  a_log_t_ref, d_ref, w_out_ref, out_ref,
                  xc_ref, dt_ref, y_ref, b_ref, c_ref):
    """One batch element.  All refs live in VMEM."""
    x = x_ref[0]                                     # (L, d_model) bf16
    L = x.shape[0]
    d_conv, d_inner = conv_w_ref.shape               # conv weight stored (d_conv, d_inner)
    d_state = a_log_t_ref.shape[0]
    dt_rank = w_dt_ref.shape[0]

    # ---- in_proj, x branch: (L, d_model) @ (d_model, d_inner), bf16 -> f32 acc ----
    xi = jnp.dot(x, w_in_x_ref[...], preferred_element_type=jnp.float32)   # (L, d_inner)

    # ---- causal depthwise conv1d: sublane roll + mask + VPU multiply-add per tap ----
    conv_w = conv_w_ref[...]                         # (d_conv, d_inner) f32
    t_iota = lax.broadcasted_iota(jnp.int32, (L, 1), 0)
    acc = jnp.zeros((L, d_inner), jnp.float32) + conv_b_ref[...]
    for k in range(d_conv):                          # static, d_conv = 4
        shift = d_conv - 1 - k
        if shift == 0:
            shifted = xi
        else:
            rolled = pltpu.roll(xi, shift, axis=0)               # rolled[t] = xi[t-shift]
            shifted = jnp.where(t_iota >= shift, rolled, 0.0)    # zero the wrapped rows
        acc = acc + shifted * conv_w[k:k + 1, :]
    x_conv = acc * jax.nn.sigmoid(acc)               # SiLU, f32 (L, d_inner)
    xc_ref[...] = x_conv
    xc_bf = x_conv.astype(jnp.bfloat16)

    # ---- x_proj, split weights -> per-matmul dense outputs stored to scratch ----
    b_ref[...] = jnp.dot(xc_bf, w_x_b_ref[...], preferred_element_type=jnp.float32)
    c_ref[...] = jnp.dot(xc_bf, w_x_c_ref[...], preferred_element_type=jnp.float32)
    dt_in = jnp.dot(x_conv, w_x_dt_ref[...], preferred_element_type=jnp.float32)  # (L, dt_rank)

    # ---- dt_proj as VPU rank-k broadcast sum (tiny dt_rank), then softplus ----
    w_dt = w_dt_ref[...]                             # (dt_rank, d_inner) f32
    dt_lin = jnp.zeros((L, d_inner), jnp.float32) + b_dt_ref[...]
    for k in range(dt_rank):                         # static, dt_rank = ceil(d_model/16)
        dt_lin = dt_lin + dt_in[:, k:k + 1] * w_dt[k:k + 1, :]
    dt_ref[...] = jax.nn.softplus(dt_lin)            # (L, d_inner) f32

    A = -jnp.exp(a_log_t_ref[...])                   # (d_state, d_inner) f32

    # ---- selective scan: chunked sequential recurrence, inner chunk fully unrolled ----
    def chunk_step(ci, h):
        t0 = pl.multiple_of(ci * _CHUNK, _CHUNK)
        dt_c = dt_ref[pl.ds(t0, _CHUNK), :]                      # (CH, d_inner)
        xc_c = xc_ref[pl.ds(t0, _CHUNK), :]                      # (CH, d_inner)
        u_c = dt_c * xc_c
        B_cT = jnp.transpose(b_ref[pl.ds(t0, _CHUNK), :])        # (d_state, CH)
        C_cT = jnp.transpose(c_ref[pl.ds(t0, _CHUNK), :])        # (d_state, CH)
        rows = []
        for i in range(_CHUNK):                                  # static unroll
            dA = jnp.exp(A * dt_c[i:i + 1, :])                   # EUP, (d_state, d_inner)
            h = dA * h + B_cT[:, i:i + 1] * u_c[i:i + 1, :]      # VPU broadcasts
            rows.append(jnp.sum(C_cT[:, i:i + 1] * h, axis=0, keepdims=True))  # XLU reduce
        # single sublane-aligned (CH, d_inner) store per chunk
        y_ref[pl.ds(t0, _CHUNK), :] = jnp.concatenate(rows, axis=0)
        return h

    h0 = jnp.zeros((d_state, d_inner), jnp.float32)
    lax.fori_loop(0, L // _CHUNK, chunk_step, h0)

    # ---- gate with SiLU(z) (computed lazily), add D*x_conv, out_proj ----
    z = jnp.dot(x_ref[0], w_in_z_ref[...], preferred_element_type=jnp.float32)  # (L, d_inner)
    y = (y_ref[...] + d_ref[...] * xc_ref[...]) * (z * jax.nn.sigmoid(z))
    out_ref[0] = jnp.dot(y.astype(jnp.bfloat16), w_out_ref[...],
                         preferred_element_type=jnp.float32)                    # (L, d_model_pad)


def init_params(key, d_model, d_state=16, d_conv=4, expand=2):
    """Deterministic synthetic parameters, shapes as in mamba_ssm.Mamba.__init__."""
    d_inner = expand * d_model
    dt_rank = math.ceil(d_model / 16)
    ks = jax.random.split(key, 6)
    w_in = jax.random.normal(ks[0], (d_model, 2 * d_inner), jnp.float32) * 0.1
    conv_w_t = jax.random.normal(ks[1], (d_conv, d_inner), jnp.float32) / math.sqrt(d_conv)
    conv_b = jnp.zeros((1, d_inner), jnp.float32)
    w_x = jax.random.normal(ks[2], (d_inner, dt_rank + 2 * d_state), jnp.float32) * 0.1
    dt_init_std = dt_rank ** -0.5
    w_dt = jax.random.uniform(ks[3], (dt_rank, d_inner), jnp.float32,
                              -dt_init_std, dt_init_std)
    # dt bias = softplus^{-1}(dt), dt ~ logU(1e-3, 1e-1)  (Mamba-style init)
    dt = jnp.exp(jax.random.uniform(ks[4], (d_inner,), jnp.float32)
                 * (math.log(0.1) - math.log(0.001)) + math.log(0.001))
    dt = jnp.clip(dt, 1e-4)
    b_dt = (dt + jnp.log(-jnp.expm1(-dt))).reshape(1, d_inner)
    # A_log = log([1..d_state]) per inner channel; stored transposed (d_state, d_inner)
    a_log_t = jnp.log(jnp.tile(jnp.arange(1, d_state + 1, dtype=jnp.float32)[:, None],
                               (1, d_inner)))
    d_vec = jnp.ones((1, d_inner), jnp.float32)
    w_out = jax.random.normal(ks[5], (d_inner, d_model), jnp.float32) * 0.1
    return dict(w_in=w_in, conv_w_t=conv_w_t, conv_b=conv_b, w_x=w_x, w_dt=w_dt,
                b_dt=b_dt, a_log_t=a_log_t, d=d_vec, w_out=w_out)


def mamba_cortex_forward(x_ncl, p):
    """Matches MambaCortex.forward: x is (B, d_model, L), output is (B, d_model, L)."""
    x_bld = jnp.transpose(x_ncl, (0, 2, 1)).astype(jnp.bfloat16)
    B, L, d_model = x_bld.shape
    assert L % _CHUNK == 0, "sequence length must be a multiple of the scan chunk (8)"

    d_inner = p["w_in"].shape[1] // 2
    d_state = p["a_log_t"].shape[0]
    dt_rank = p["w_dt"].shape[0]
    d_model_pad = ((d_model + 127) // 128) * 128

    # Split fused weights (dense per-matmul outputs); big weights in bf16.
    w_in_x = p["w_in"][:, :d_inner].astype(jnp.bfloat16)
    w_in_z = p["w_in"][:, d_inner:].astype(jnp.bfloat16)
    w_x_dt = p["w_x"][:, :dt_rank]                                    # f32 (dt path)
    w_x_b = p["w_x"][:, dt_rank:dt_rank + d_state].astype(jnp.bfloat16)
    w_x_c = p["w_x"][:, dt_rank + d_state:].astype(jnp.bfloat16)
    w_out_p = jnp.pad(p["w_out"], ((0, 0), (0, d_model_pad - d_model))).astype(jnp.bfloat16)

    args = (x_bld, w_in_x, w_in_z, p["conv_w_t"], p["conv_b"], w_x_dt, w_x_b, w_x_c,
            p["w_dt"], p["b_dt"], p["a_log_t"], p["d"], w_out_p)

    in_specs = [pl.BlockSpec((1, L, d_model), lambda b: (b, 0, 0))]
    for a in args[1:]:
        in_specs.append(pl.BlockSpec(a.shape, lambda b: (0, 0)))      # full-array blocks

    out_padded = pl.pallas_call(
        _mamba_kernel,
        out_shape=jax.ShapeDtypeStruct((B, L, d_model_pad), jnp.float32),
        grid=(B,),
        in_specs=in_specs,
        out_specs=pl.BlockSpec((1, L, d_model_pad), lambda b: (b, 0, 0)),
        scratch_shapes=[pltpu.VMEM((L, d_inner), jnp.float32),   # x_conv
                        pltpu.VMEM((L, d_inner), jnp.float32),   # dt
                        pltpu.VMEM((L, d_inner), jnp.float32),   # y (scan output)
                        pltpu.VMEM((L, d_state), jnp.float32),   # B
                        pltpu.VMEM((L, d_state), jnp.float32)],  # C
        compiler_params=pltpu.CompilerParams(dimension_semantics=("parallel",)),
    )(*args)
    return jnp.transpose(out_padded[:, :, :d_model], (0, 2, 1))


def mamba_cortex_ref(x_ncl, p):
    """Pure-JAX reference (same math, f32 HIGHEST precision) for correctness checking."""
    d_inner = p["w_in"].shape[1] // 2
    d_state = p["a_log_t"].shape[0]
    d_conv = p["conv_w_t"].shape[0]
    dt_rank = p["w_dt"].shape[0]
    hp = jax.lax.Precision.HIGHEST
    x_bld = jnp.transpose(x_ncl, (0, 2, 1)).astype(jnp.float32)

    def one(x):
        L = x.shape[0]
        xz = jnp.dot(x, p["w_in"], precision=hp)
        xi, z = xz[:, :d_inner], xz[:, d_inner:]
        xpad = jnp.pad(xi, ((d_conv - 1, 0), (0, 0)))
        conv = p["conv_b"][0]
        for k in range(d_conv):
            conv = conv + xpad[k:k + L] * p["conv_w_t"][k][None, :]
        xc = conv * jax.nn.sigmoid(conv)
        x_dbl = jnp.dot(xc, p["w_x"], precision=hp)
        dt = jax.nn.softplus(jnp.dot(x_dbl[:, :dt_rank], p["w_dt"], precision=hp)
                             + p["b_dt"][0])
        Bm = x_dbl[:, dt_rank:dt_rank + d_state]
        Cm = x_dbl[:, dt_rank + d_state:]
        A = -jnp.exp(p["a_log_t"])                   # (d_state, d_inner)

        def step(h, inp):
            dt_t, x_t, B_t, C_t = inp
            h = jnp.exp(A * dt_t[None, :]) * h + B_t[:, None] * (dt_t * x_t)[None, :]
            y_t = jnp.sum(C_t[:, None] * h, axis=0) + p["d"][0] * x_t
            return h, y_t

        _, ys = jax.lax.scan(step, jnp.zeros((d_state, d_inner), jnp.float32),
                             (dt, xc, Bm, Cm))
        y = ys * (z * jax.nn.sigmoid(z))
        return jnp.dot(y, p["w_out"], precision=hp)

    return jnp.transpose(jax.vmap(one)(x_bld), (0, 2, 1))


if __name__ == "__main__":
    key = jax.random.PRNGKey(0)
    kx, kp = jax.random.split(key)
    B, d_model, L = 2, 32, 16          # input to MambaCortex is (B, d_model, L)
    x = jax.random.normal(kx, (B, d_model, L), jnp.float32)
    params = init_params(kp, d_model, d_state=16, d_conv=4, expand=2)

    out = mamba_cortex_forward(x, params)
    out = jax.block_until_ready(out)
    assert out.shape == (B, d_model, L)

    ref = mamba_cortex_ref(x, params)
    np.testing.assert_allclose(np.asarray(out), np.asarray(ref), rtol=2e-2, atol=5e-3)
    print("KERNEL_OK")
</pallas_src>

<mosaic_0001>
module attributes {stable_mosaic.version = 11 : i64} {
  func.func @_mamba_kernel(%arg0: i32, %arg1: memref<1x16x32xbf16, #tpu.memory_space<vmem>>, %arg2: memref<32x64xbf16, #tpu.memory_space<vmem>>, %arg3: memref<32x64xbf16, #tpu.memory_space<vmem>>, %arg4: memref<4x64xf32, #tpu.memory_space<vmem>>, %arg5: memref<1x64xf32, #tpu.memory_space<vmem>>, %arg6: memref<64x2xf32, #tpu.memory_space<vmem>>, %arg7: memref<64x16xbf16, #tpu.memory_space<vmem>>, %arg8: memref<64x16xbf16, #tpu.memory_space<vmem>>, %arg9: memref<2x64xf32, #tpu.memory_space<vmem>>, %arg10: memref<1x64xf32, #tpu.memory_space<vmem>>, %arg11: memref<16x64xf32, #tpu.memory_space<vmem>>, %arg12: memref<1x64xf32, #tpu.memory_space<vmem>>, %arg13: memref<64x128xbf16, #tpu.memory_space<vmem>>, %arg14: memref<1x16x128xf32, #tpu.memory_space<vmem>>, %arg15: memref<16x64xf32, #tpu.memory_space<vmem>>, %arg16: memref<16x64xf32, #tpu.memory_space<vmem>>, %arg17: memref<16x64xf32, #tpu.memory_space<vmem>>, %arg18: memref<16x16xf32, #tpu.memory_space<vmem>>, %arg19: memref<16x16xf32, #tpu.memory_space<vmem>>) attributes {dimension_semantics = [#tpu.dimension_semantics<parallel>], iteration_bounds = array<i64: 2>, scalar_prefetch = 0 : i64, scratch_operands = 5 : i64, tpu.core_type = #tpu.core_type<tc>, window_params = [{transform_indices = @transform_0, window_bounds = array<i64: 1, 16, 32>}, {pipeline_mode = #tpu.pipeline_mode<synchronous>, transform_indices = @transform_1, window_bounds = array<i64: 32, 64>}, {pipeline_mode = #tpu.pipeline_mode<synchronous>, transform_indices = @transform_2, window_bounds = array<i64: 32, 64>}, {pipeline_mode = #tpu.pipeline_mode<synchronous>, transform_indices = @transform_3, window_bounds = array<i64: 4, 64>}, {pipeline_mode = #tpu.pipeline_mode<synchronous>, transform_indices = @transform_4, window_bounds = array<i64: 1, 64>}, {pipeline_mode = #tpu.pipeline_mode<synchronous>, transform_indices = @transform_5, window_bounds = array<i64: 64, 2>}, {pipeline_mode = #tpu.pipeline_mode<synchronous>, transform_indices = @transform_6, window_bounds = array<i64: 64, 16>}, {pipeline_mode = #tpu.pipeline_mode<synchronous>, transform_indices = @transform_7, window_bounds = array<i64: 64, 16>}, {pipeline_mode = #tpu.pipeline_mode<synchronous>, transform_indices = @transform_8, window_bounds = array<i64: 2, 64>}, {pipeline_mode = #tpu.pipeline_mode<synchronous>, transform_indices = @transform_9, window_bounds = array<i64: 1, 64>}, {pipeline_mode = #tpu.pipeline_mode<synchronous>, transform_indices = @transform_10, window_bounds = array<i64: 16, 64>}, {pipeline_mode = #tpu.pipeline_mode<synchronous>, transform_indices = @transform_11, window_bounds = array<i64: 1, 64>}, {pipeline_mode = #tpu.pipeline_mode<synchronous>, transform_indices = @transform_12, window_bounds = array<i64: 64, 128>}, {transform_indices = @transform_13, window_bounds = array<i64: 1, 16, 128>}]} {
    %c0 = arith.constant 0 : index
    %c0_0 = arith.constant 0 : index
    %c0_1 = arith.constant 0 : index
    %0 = vector.load %arg1[%c0, %c0_0, %c0_1] : memref<1x16x32xbf16, #tpu.memory_space<vmem>>, vector<1x16x32xbf16>
    %1 = vector.shape_cast %0 : vector<1x16x32xbf16> to vector<16x32xbf16>
    %c0_2 = arith.constant 0 : index
    %c0_3 = arith.constant 0 : index
    %2 = vector.load %arg2[%c0_2, %c0_3] : memref<32x64xbf16, #tpu.memory_space<vmem>>, vector<32x64xbf16>
    %cst = arith.constant dense<0.000000e+00> : vector<16x64xf32>
    %3 = tpu.matmul %1, %2, %cst {dimension_numbers = #tpu.dot_dimension_numbers<[1], [0], [0], [1], [0, 0, 1, 1], [], []>} : vector<16x32xbf16>, vector<32x64xbf16>, vector<16x64xf32> -> vector<16x64xf32>
    %c0_4 = arith.constant 0 : index
    %c0_5 = arith.constant 0 : index
    %4 = vector.load %arg4[%c0_4, %c0_5] : memref<4x64xf32, #tpu.memory_space<vmem>>, vector<4x64xf32>
    %5 = tpu.iota {dimensions = array<i32: 0>} : vector<16x1xi32>
    %cst_6 = arith.constant 0.000000e+00 : f32
    %6 = vector.broadcast %cst_6 : f32 to vector<16x64xf32>
    %c0_7 = arith.constant 0 : index
    %c0_8 = arith.constant 0 : index
    %7 = vector.load %arg5[%c0_7, %c0_8] : memref<1x64xf32, #tpu.memory_space<vmem>>, vector<1x64xf32>
    %8 = vector.broadcast %7 : vector<1x64xf32> to vector<16x64xf32>
    %9 = arith.addf %6, %8 : vector<16x64xf32>
    %c3_i32 = arith.constant 3 : i32
    %10 = tpu.dynamic_rotate %3 by %c3_i32 dim 0 : vector<16x64xf32>, i32 -> vector<16x64xf32>
    %c3_i32_9 = arith.constant 3 : i32
    %11 = vector.broadcast %c3_i32_9 : i32 to vector<16x1xi32>
    %12 = arith.cmpi sge, %5, %11 : vector<16x1xi32>
    %cst_10 = arith.constant 0.000000e+00 : f32
    %13 = vector.shape_cast %12 : vector<16x1xi1> to vector<16x1xi1>
    %14 = vector.broadcast %13 : vector<16x1xi1> to vector<16x64xi1>
    %15 = vector.broadcast %cst_10 : f32 to vector<16x64xf32>
    %16 = arith.select %14, %10, %15 : vector<16x64xi1>, vector<16x64xf32>
    %17 = vector.extract_strided_slice %4 {offsets = [0, 0], sizes = [1, 64], strides = [1, 1]} : vector<4x64xf32> to vector<1x64xf32>
    %18 = vector.broadcast %17 : vector<1x64xf32> to vector<16x64xf32>
    %19 = arith.mulf %16, %18 : vector<16x64xf32>
    %20 = arith.addf %9, %19 : vector<16x64xf32>
    %c2_i32 = arith.constant 2 : i32
    %21 = tpu.dynamic_rotate %3 by %c2_i32 dim 0 : vector<16x64xf32>, i32 -> vector<16x64xf32>
    %c2_i32_11 = arith.constant 2 : i32
    %22 = vector.broadcast %c2_i32_11 : i32 to vector<16x1xi32>
    %23 = arith.cmpi sge, %5, %22 : vector<16x1xi32>
    %cst_12 = arith.constant 0.000000e+00 : f32
    %24 = vector.shape_cast %23 : vector<16x1xi1> to vector<16x1xi1>
    %25 = vector.broadcast %24 : vector<16x1xi1> to vector<16x64xi1>
    %26 = vector.broadcast %cst_12 : f32 to vector<16x64xf32>
    %27 = arith.select %25, %21, %26 : vector<16x64xi1>, vector<16x64xf32>
    %28 = vector.extract_strided_slice %4 {offsets = [1, 0], sizes = [1, 64], strides = [1, 1]} : vector<4x64xf32> to vector<1x64xf32>
    %29 = vector.broadcast %28 : vector<1x64xf32> to vector<16x64xf32>
    %30 = arith.mulf %27, %29 : vector<16x64xf32>
    %31 = arith.addf %20, %30 : vector<16x64xf32>
    %c1_i32 = arith.constant 1 : i32
    %32 = tpu.dynamic_rotate %3 by %c1_i32 dim 0 : vector<16x64xf32>, i32 -> vector<16x64xf32>
    %c1_i32_13 = arith.constant 1 : i32
    %33 = vector.broadcast %c1_i32_13 : i32 to vector<16x1xi32>
    %34 = arith.cmpi sge, %5, %33 : vector<16x1xi32>
    %cst_14 = arith.constant 0.000000e+00 : f32
    %35 = vector.shape_cast %34 : vector<16x1xi1> to vector<16x1xi1>
    %36 = vector.broadcast %35 : vector<16x1xi1> to vector<16x64xi1>
    %37 = vector.broadcast %cst_14 : f32 to vector<16x64xf32>
    %38 = arith.select %36, %32, %37 : vector<16x64xi1>, vector<16x64xf32>
    %39 = vector.extract_strided_slice %4 {offsets = [2, 0], sizes = [1, 64], strides = [1, 1]} : vector<4x64xf32> to vector<1x64xf32>
    %40 = vector.broadcast %39 : vector<1x64xf32> to vector<16x64xf32>
    %41 = arith.mulf %38, %40 : vector<16x64xf32>
    %42 = arith.addf %31, %41 : vector<16x64xf32>
    %43 = vector.extract_strided_slice %4 {offsets = [3, 0], sizes = [1, 64], strides = [1, 1]} : vector<4x64xf32> to vector<1x64xf32>
    %44 = vector.broadcast %43 : vector<1x64xf32> to vector<16x64xf32>
    %45 = arith.mulf %3, %44 : vector<16x64xf32>
    %46 = arith.addf %42, %45 : vector<16x64xf32>
    %47 = arith.negf %46 : vector<16x64xf32>
    %48 = math.exp %47 : vector<16x64xf32>
    %cst_15 = arith.constant 1.000000e+00 : f32
    %49 = vector.broadcast %cst_15 : f32 to vector<16x64xf32>
    %50 = arith.addf %49, %48 : vector<16x64xf32>
    %51 = arith.divf %49, %50 : vector<16x64xf32>
    %52 = arith.mulf %46, %51 : vector<16x64xf32>
    %c0_16 = arith.constant 0 : index
    %c0_17 = arith.constant 0 : index
    %53 = vector.load %arg15[%c0_16, %c0_17] : memref<16x64xf32, #tpu.memory_space<vmem>>, vector<16x64xf32>
    tpu.vector_store %arg15[%c0_16, %c0_17], %52 {strides = array<i32>} : memref<16x64xf32, #tpu.memory_space<vmem>>, vector<16x64xf32>,
    %54 = arith.truncf %52 : vector<16x64xf32> to vector<16x64xbf16>
    %c0_18 = arith.constant 0 : index
    %c0_19 = arith.constant 0 : index
    %55 = vector.load %arg7[%c0_18, %c0_19] : memref<64x16xbf16, #tpu.memory_space<vmem>>, vector<64x16xbf16>
    %cst_20 = arith.constant dense<0.000000e+00> : vector<16x16xf32>
    %56 = tpu.matmul %54, %55, %cst_20 {dimension_numbers = #tpu.dot_dimension_numbers<[1], [0], [0], [1], [0, 0, 1, 1], [], []>} : vector<16x64xbf16>, vector<64x16xbf16>, vector<16x16xf32> -> vector<16x16xf32>
    %c0_21 = arith.constant 0 : index
    %c0_22 = arith.constant 0 : index
    %57 = vector.load %arg18[%c0_21, %c0_22] : memref<16x16xf32, #tpu.memory_space<vmem>>, vector<16x16xf32>
    tpu.vector_store %arg18[%c0_21, %c0_22], %56 {strides = array<i32>} : memref<16x16xf32, #tpu.memory_space<vmem>>, vector<16x16xf32>,
    %c0_23 = arith.constant 0 : index
    %c0_24 = arith.constant 0 : index
    %58 = vector.load %arg8[%c0_23, %c0_24] : memref<64x16xbf16, #tpu.memory_space<vmem>>, vector<64x16xbf16>
    %cst_25 = arith.constant dense<0.000000e+00> : vector<16x16xf32>
    %59 = tpu.matmul %54, %58, %cst_25 {dimension_numbers = #tpu.dot_dimension_numbers<[1], [0], [0], [1], [0, 0, 1, 1], [], []>} : vector<16x64xbf16>, vector<64x16xbf16>, vector<16x16xf32> -> vector<16x16xf32>
    %c0_26 = arith.constant 0 : index
    %c0_27 = arith.constant 0 : index
    %60 = vector.load %arg19[%c0_26, %c0_27] : memref<16x16xf32, #tpu.memory_space<vmem>>, vector<16x16xf32>
    tpu.vector_store %arg19[%c0_26, %c0_27], %59 {strides = array<i32>} : memref<16x16xf32, #tpu.memory_space<vmem>>, vector<16x16xf32>,
    %c0_28 = arith.constant 0 : index
    %c0_29 = arith.constant 0 : index
    %61 = vector.load %arg6[%c0_28, %c0_29] : memref<64x2xf32, #tpu.memory_space<vmem>>, vector<64x2xf32>
    %cst_30 = arith.constant dense<0.000000e+00> : vector<16x2xf32>
    %62 = tpu.matmul %52, %61, %cst_30 {dimension_numbers = #tpu.dot_dimension_numbers<[1], [0], [0], [1], [0, 0, 1, 1], [], []>} : vector<16x64xf32>, vector<64x2xf32>, vector<16x2xf32> -> vector<16x2xf32>
    %c0_31 = arith.constant 0 : index
    %c0_32 = arith.constant 0 : index
    %63 = vector.load %arg9[%c0_31, %c0_32] : memref<2x64xf32, #tpu.memory_space<vmem>>, vector<2x64xf32>
    %cst_33 = arith.constant 0.000000e+00 : f32
    %64 = vector.broadcast %cst_33 : f32 to vector<16x64xf32>
    %c0_34 = arith.constant 0 : index
    %c0_35 = arith.constant 0 : index
    %65 = vector.load %arg10[%c0_34, %c0_35] : memref<1x64xf32, #tpu.memory_space<vmem>>, vector<1x64xf32>
    %66 = vector.broadcast %65 : vector<1x64xf32> to vector<16x64xf32>
    %67 = arith.addf %64, %66 : vector<16x64xf32>
    %68 = vector.extract_strided_slice %62 {offsets = [0, 0], sizes = [16, 1], strides = [1, 1]} : vector<16x2xf32> to vector<16x1xf32>
    %69 = vector.extract_strided_slice %63 {offsets = [0, 0], sizes = [1, 64], strides = [1, 1]} : vector<2x64xf32> to vector<1x64xf32>
    %70 = vector.broadcast %68 : vector<16x1xf32> to vector<16x64xf32>
    %71 = vector.broadcast %69 : vector<1x64xf32> to vector<16x64xf32>
    %72 = arith.mulf %70, %71 : vector<16x64xf32>
    %73 = arith.addf %67, %72 : vector<16x64xf32>
    %74 = vector.extract_strided_slice %62 {offsets = [0, 1], sizes = [16, 1], strides = [1, 1]} : vector<16x2xf32> to vector<16x1xf32>
    %75 = vector.extract_strided_slice %63 {offsets = [1, 0], sizes = [1, 64], strides = [1, 1]} : vector<2x64xf32> to vector<1x64xf32>
    %76 = vector.broadcast %74 : vector<16x1xf32> to vector<16x64xf32>
    %77 = vector.broadcast %75 : vector<1x64xf32> to vector<16x64xf32>
    %78 = arith.mulf %76, %77 : vector<16x64xf32>
    %79 = arith.addf %73, %78 : vector<16x64xf32>
    %cst_36 = arith.constant 0.000000e+00 : f32
    %80 = vector.broadcast %cst_36 : f32 to vector<16x64xf32>
    %81 = arith.maximumf %79, %80 : vector<16x64xf32>
    %82 = vector.broadcast %cst_36 : f32 to vector<16x64xf32>
    %83 = arith.subf %79, %82 : vector<16x64xf32>
    %84 = arith.cmpf one, %83, %83 : vector<16x64xf32>
    %85 = vector.broadcast %cst_36 : f32 to vector<16x64xf32>
    %86 = arith.addf %79, %85 : vector<16x64xf32>
    %87 = math.absf %83 : vector<16x64xf32>
    %cst_37 = arith.constant 0.000000e+00 : f32
    %88 = vector.broadcast %cst_37 : f32 to vector<16x64xf32>
    %89 = arith.subf %88, %87 : vector<16x64xf32>
    %90 = math.exp %89 : vector<16x64xf32>
    %91 = math.log1p %90 : vector<16x64xf32>
    %92 = arith.addf %81, %91 : vector<16x64xf32>
    %93 = arith.select %84, %86, %92 : vector<16x64xi1>, vector<16x64xf32>
    %c0_38 = arith.constant 0 : index
    %c0_39 = arith.constant 0 : index
    %94 = vector.load %arg16[%c0_38, %c0_39] : memref<16x64xf32, #tpu.memory_space<vmem>>, vector<16x64xf32>
    tpu.vector_store %arg16[%c0_38, %c0_39], %93 {strides = array<i32>} : memref<16x64xf32, #tpu.memory_space<vmem>>, vector<16x64xf32>,
    %c0_40 = arith.constant 0 : index
    %c0_41 = arith.constant 0 : index
    %95 = vector.load %arg11[%c0_40, %c0_41] : memref<16x64xf32, #tpu.memory_space<vmem>>, vector<16x64xf32>
    %96 = math.exp %95 : vector<16x64xf32>
    %cst_42 = arith.constant 0.000000e+00 : f32
    %97 = vector.broadcast %cst_42 : f32 to vector<16x64xf32>
    %98 = arith.subf %97, %96 : vector<16x64xf32>
    %cst_43 = arith.constant 0.000000e+00 : f32
    %99 = vector.broadcast %cst_43 : f32 to vector<16x64xf32>
    %c0_i32 = arith.constant 0 : i32
    %c2_i32_44 = arith.constant 2 : i32
    %100 = arith.addi %c0_i32, %c2_i32_44 : i32
    %c1_i32_45 = arith.constant 1 : i32
    %101 = scf.for %arg20 = %c0_i32 to %100 step %c1_i32_45 iter_args(%arg21 = %99) -> (vector<16x64xf32>)  : i32 {
      %c8_i32 = arith.constant 8 : i32
      %125 = arith.muli %arg20, %c8_i32 : i32
      %126 = tpu.assume_multiple %125, 8 : i32
      %127 = arith.index_cast %126 : i32 to index
      %c0_66 = arith.constant 0 : index
      %128 = vector.load %arg16[%127, %c0_66] : memref<16x64xf32, #tpu.memory_space<vmem>>, vector<8x64xf32>
      %129 = arith.index_cast %126 : i32 to index
      %c0_67 = arith.constant 0 : index
      %130 = vector.load %arg15[%129, %c0_67] : memref<16x64xf32, #tpu.memory_space<vmem>>, vector<8x64xf32>
      %131 = arith.mulf %128, %130 : vector<8x64xf32>
      %132 = arith.index_cast %126 : i32 to index
      %c0_68 = arith.constant 0 : index
      %133 = vector.load %arg18[%132, %c0_68] : memref<16x16xf32, #tpu.memory_space<vmem>>, vector<8x16xf32>
      %134 = tpu.transpose %133, [1, 0] : vector<8x16xf32> -> vector<16x8xf32>
      %135 = arith.index_cast %126 : i32 to index
      %c0_69 = arith.constant 0 : index
      %136 = vector.load %arg19[%135, %c0_69] : memref<16x16xf32, #tpu.memory_space<vmem>>, vector<8x16xf32>
      %137 = tpu.transpose %136, [1, 0] : vector<8x16xf32> -> vector<16x8xf32>
      %138 = vector.extract_strided_slice %128 {offsets = [0, 0], sizes = [1, 64], strides = [1, 1]} : vector<8x64xf32> to vector<1x64xf32>
      %139 = vector.broadcast %138 : vector<1x64xf32> to vector<16x64xf32>
      %140 = arith.mulf %98, %139 : vector<16x64xf32>
      %141 = math.exp %140 : vector<16x64xf32>
      %142 = arith.mulf %141, %arg21 : vector<16x64xf32>
      %143 = vector.extract_strided_slice %134 {offsets = [0, 0], sizes = [16, 1], strides = [1, 1]} : vector<16x8xf32> to vector<16x1xf32>
      %144 = vector.extract_strided_slice %131 {offsets = [0, 0], sizes = [1, 64], strides = [1, 1]} : vector<8x64xf32> to vector<1x64xf32>
      %145 = vector.broadcast %143 : vector<16x1xf32> to vector<16x64xf32>
      %146 = vector.broadcast %144 : vector<1x64xf32> to vector<16x64xf32>
      %147 = arith.mulf %145, %146 : vector<16x64xf32>
      %148 = arith.addf %142, %147 : vector<16x64xf32>
      %149 = vector.extract_strided_slice %137 {offsets = [0, 0], sizes = [16, 1], strides = [1, 1]} : vector<16x8xf32> to vector<16x1xf32>
      %150 = vector.broadcast %149 : vector<16x1xf32> to vector<16x64xf32>
      %151 = arith.mulf %150, %148 : vector<16x64xf32>
      %cst_70 = arith.constant dense<0.000000e+00> : vector<64xf32>
      %152 = vector.multi_reduction <add>, %151, %cst_70 [0] : vector<16x64xf32> to vector<64xf32>
      %153 = vector.shape_cast %152 : vector<64xf32> to vector<1x64xf32>
      %154 = vector.extract_strided_slice %128 {offsets = [1, 0], sizes = [1, 64], strides = [1, 1]} : vector<8x64xf32> to vector<1x64xf32>
      %155 = vector.broadcast %154 : vector<1x64xf32> to vector<16x64xf32>
      %156 = arith.mulf %98, %155 : vector<16x64xf32>
      %157 = math.exp %156 : vector<16x64xf32>
      %158 = arith.mulf %157, %148 : vector<16x64xf32>
      %159 = vector.extract_strided_slice %134 {offsets = [0, 1], sizes = [16, 1], strides = [1, 1]} : vector<16x8xf32> to vector<16x1xf32>
      %160 = vector.extract_strided_slice %131 {offsets = [1, 0], sizes = [1, 64], strides = [1, 1]} : vector<8x64xf32> to vector<1x64xf32>
      %161 = vector.broadcast %159 : vector<16x1xf32> to vector<16x64xf32>
      %162 = vector.broadcast %160 : vector<1x64xf32> to vector<16x64xf32>
      %163 = arith.mulf %161, %162 : vector<16x64xf32>
      %164 = arith.addf %158, %163 : vector<16x64xf32>
      %165 = vector.extract_strided_slice %137 {offsets = [0, 1], sizes = [16, 1], strides = [1, 1]} : vector<16x8xf32> to vector<16x1xf32>
      %166 = vector.broadcast %165 : vector<16x1xf32> to vector<16x64xf32>
      %167 = arith.mulf %166, %164 : vector<16x64xf32>
      %cst_71 = arith.constant dense<0.000000e+00> : vector<64xf32>
      %168 = vector.multi_reduction <add>, %167, %cst_71 [0] : vector<16x64xf32> to vector<64xf32>
      %169 = vector.shape_cast %168 : vector<64xf32> to vector<1x64xf32>
      %170 = vector.extract_strided_slice %128 {offsets = [2, 0], sizes = [1, 64], strides = [1, 1]} : vector<8x64xf32> to vector<1x64xf32>
      %171 = vector.broadcast %170 : vector<1x64xf32> to vector<16x64xf32>
      %172 = arith.mulf %98, %171 : vector<16x64xf32>
      %173 = math.exp %172 : vector<16x64xf32>
      %174 = arith.mulf %173, %164 : vector<16x64xf32>
      %175 = vector.extract_strided_slice %134 {offsets = [0, 2], sizes = [16, 1], strides = [1, 1]} : vector<16x8xf32> to vector<16x1xf32>
      %176 = vector.extract_strided_slice %131 {offsets = [2, 0], sizes = [1, 64], strides = [1, 1]} : vector<8x64xf32> to vector<1x64xf32>
      %177 = vector.broadcast %175 : vector<16x1xf32> to vector<16x64xf32>
      %178 = vector.broadcast %176 : vector<1x64xf32> to vector<16x64xf32>
      %179 = arith.mulf %177, %178 : vector<16x64xf32>
      %180 = arith.addf %174, %179 : vector<16x64xf32>
      %181 = vector.extract_strided_slice %137 {offsets = [0, 2], sizes = [16, 1], strides = [1, 1]} : vector<16x8xf32> to vector<16x1xf32>
      %182 = vector.broadcast %181 : vector<16x1xf32> to vector<16x64xf32>
      %183 = arith.mulf %182, %180 : vector<16x64xf32>
      %cst_72 = arith.constant dense<0.000000e+00> : vector<64xf32>
      %184 = vector.multi_reduction <add>, %183, %cst_72 [0] : vector<16x64xf32> to vector<64xf32>
      %185 = vector.shape_cast %184 : vector<64xf32> to vector<1x64xf32>
      %186 = vector.extract_strided_slice %128 {offsets = [3, 0], sizes = [1, 64], strides = [1, 1]} : vector<8x64xf32> to vector<1x64xf32>
      %187 = vector.broadcast %186 : vector<1x64xf32> to vector<16x64xf32>
      %188 = arith.mulf %98, %187 : vector<16x64xf32>
      %189 = math.exp %188 : vector<16x64xf32>
      %190 = arith.mulf %189, %180 : vector<16x64xf32>
      %191 = vector.extract_strided_slice %134 {offsets = [0, 3], sizes = [16, 1], strides = [1, 1]} : vector<16x8xf32> to vector<16x1xf32>
      %192 = vector.extract_strided_slice %131 {offsets = [3, 0], sizes = [1, 64], strides = [1, 1]} : vector<8x64xf32> to vector<1x64xf32>
      %193 = vector.broadcast %191 : vector<16x1xf32> to vector<16x64xf32>
      %194 = vector.broadcast %192 : vector<1x64xf32> to vector<16x64xf32>
      %195 = arith.mulf %193, %194 : vector<16x64xf32>
      %196 = arith.addf %190, %195 : vector<16x64xf32>
      %197 = vector.extract_strided_slice %137 {offsets = [0, 3], sizes = [16, 1], strides = [1, 1]} : vector<16x8xf32> to vector<16x1xf32>
      %198 = vector.broadcast %197 : vector<16x1xf32> to vector<16x64xf32>
      %199 = arith.mulf %198, %196 : vector<16x64xf32>
      %cst_73 = arith.constant dense<0.000000e+00> : vector<64xf32>
      %200 = vector.multi_reduction <add>, %199, %cst_73 [0] : vector<16x64xf32> to vector<64xf32>
      %201 = vector.shape_cast %200 : vector<64xf32> to vector<1x64xf32>
      %202 = vector.extract_strided_slice %128 {offsets = [4, 0], sizes = [1, 64], strides = [1, 1]} : vector<8x64xf32> to vector<1x64xf32>
      %203 = vector.broadcast %202 : vector<1x64xf32> to vector<16x64xf32>
      %204 = arith.mulf %98, %203 : vector<16x64xf32>
      %205 = math.exp %204 : vector<16x64xf32>
      %206 = arith.mulf %205, %196 : vector<16x64xf32>
      %207 = vector.extract_strided_slice %134 {offsets = [0, 4], sizes = [16, 1], strides = [1, 1]} : vector<16x8xf32> to vector<16x1xf32>
      %208 = vector.extract_strided_slice %131 {offsets = [4, 0], sizes = [1, 64], strides = [1, 1]} : vector<8x64xf32> to vector<1x64xf32>
      %209 = vector.broadcast %207 : vector<16x1xf32> to vector<16x64xf32>
      %210 = vector.broadcast %208 : vector<1x64xf32> to vector<16x64xf32>
      %211 = arith.mulf %209, %210 : vector<16x64xf32>
      %212 = arith.addf %206, %211 : vector<16x64xf32>
      %213 = vector.extract_strided_slice %137 {offsets = [0, 4], sizes = [16, 1], strides = [1, 1]} : vector<16x8xf32> to vector<16x1xf32>
      %214 = vector.broadcast %213 : vector<16x1xf32> to vector<16x64xf32>
      %215 = arith.mulf %214, %212 : vector<16x64xf32>
      %cst_74 = arith.constant dense<0.000000e+00> : vector<64xf32>
      %216 = vector.multi_reduction <add>, %215, %cst_74 [0] : vector<16x64xf32> to vector<64xf32>
      %217 = vector.shape_cast %216 : vector<64xf32> to vector<1x64xf32>
      %218 = vector.extract_strided_slice %128 {offsets = [5, 0], sizes = [1, 64], strides = [1, 1]} : vector<8x64xf32> to vector<1x64xf32>
      %219 = vector.broadcast %218 : vector<1x64xf32> to vector<16x64xf32>
      %220 = arith.mulf %98, %219 : vector<16x64xf32>
      %221 = math.exp %220 : vector<16x64xf32>
      %222 = arith.mulf %221, %212 : vector<16x64xf32>
      %223 = vector.extract_strided_slice %134 {offsets = [0, 5], sizes = [16, 1], strides = [1, 1]} : vector<16x8xf32> to vector<16x1xf32>
      %224 = vector.extract_strided_slice %131 {offsets = [5, 0], sizes = [1, 64], strides = [1, 1]} : vector<8x64xf32> to vector<1x64xf32>
      %225 = vector.broadcast %223 : vector<16x1xf32> to vector<16x64xf32>
      %226 = vector.broadcast %224 : vector<1x64xf32> to vector<16x64xf32>
      %227 = arith.mulf %225, %226 : vector<16x64xf32>
      %228 = arith.addf %222, %227 : vector<16x64xf32>
      %229 = vector.extract_strided_slice %137 {offsets = [0, 5], sizes = [16, 1], strides = [1, 1]} : vector<16x8xf32> to vector<16x1xf32>
      %230 = vector.broadcast %229 : vector<16x1xf32> to vector<16x64xf32>
      %231 = arith.mulf %230, %228 : vector<16x64xf32>
      %cst_75 = arith.constant dense<0.000000e+00> : vector<64xf32>
      %232 = vector.multi_reduction <add>, %231, %cst_75 [0] : vector<16x64xf32> to vector<64xf32>
      %233 = vector.shape_cast %232 : vector<64xf32> to vector<1x64xf32>
      %234 = vector.extract_strided_slice %128 {offsets = [6, 0], sizes = [1, 64], strides = [1, 1]} : vector<8x64xf32> to vector<1x64xf32>
      %235 = vector.broadcast %234 : vector<1x64xf32> to vector<16x64xf32>
      %236 = arith.mulf %98, %235 : vector<16x64xf32>
      %237 = math.exp %236 : vector<16x64xf32>
      %238 = arith.mulf %237, %228 : vector<16x64xf32>
      %239 = vector.extract_strided_slice %134 {offsets = [0, 6], sizes = [16, 1], strides = [1, 1]} : vector<16x8xf32> to vector<16x1xf32>
      %240 = vector.extract_strided_slice %131 {offsets = [6, 0], sizes = [1, 64], strides = [1, 1]} : vector<8x64xf32> to vector<1x64xf32>
      %241 = vector.broadcast %239 : vector<16x1xf32> to vector<16x64xf32>
      %242 = vector.broadcast %240 : vector<1x64xf32> to vector<16x64xf32>
      %243 = arith.mulf %241, %242 : vector<16x64xf32>
      %244 = arith.addf %238, %243 : vector<16x64xf32>
      %245 = vector.extract_strided_slice %137 {offsets = [0, 6], sizes = [16, 1], strides = [1, 1]} : vector<16x8xf32> to vector<16x1xf32>
      %246 = vector.broadcast %245 : vector<16x1xf32> to vector<16x64xf32>
      %247 = arith.mulf %246, %244 : vector<16x64xf32>
      %cst_76 = arith.constant dense<0.000000e+00> : vector<64xf32>
      %248 = vector.multi_reduction <add>, %247, %cst_76 [0] : vector<16x64xf32> to vector<64xf32>
      %249 = vector.shape_cast %248 : vector<64xf32> to vector<1x64xf32>
      %250 = vector.extract_strided_slice %128 {offsets = [7, 0], sizes = [1, 64], strides = [1, 1]} : vector<8x64xf32> to vector<1x64xf32>
      %251 = vector.broadcast %250 : vector<1x64xf32> to vector<16x64xf32>
      %252 = arith.mulf %98, %251 : vector<16x64xf32>
      %253 = math.exp %252 : vector<16x64xf32>
      %254 = arith.mulf %253, %244 : vector<16x64xf32>
      %255 = vector.extract_strided_slice %134 {offsets = [0, 7], sizes = [16, 1], strides = [1, 1]} : vector<16x8xf32> to vector<16x1xf32>
      %256 = vector.extract_strided_slice %131 {offsets = [7, 0], sizes = [1, 64], strides = [1, 1]} : vector<8x64xf32> to vector<1x64xf32>
      %257 = vector.broadcast %255 : vector<16x1xf32> to vector<16x64xf32>
      %258 = vector.broadcast %256 : vector<1x64xf32> to vector<16x64xf32>
      %259 = arith.mulf %257, %258 : vector<16x64xf32>
      %260 = arith.addf %254, %259 : vector<16x64xf32>
      %261 = vector.extract_strided_slice %137 {offsets = [0, 7], sizes = [16, 1], strides = [1, 1]} : vector<16x8xf32> to vector<16x1xf32>
      %262 = vector.broadcast %261 : vector<16x1xf32> to vector<16x64xf32>
      %263 = arith.mulf %262, %260 : vector<16x64xf32>
      %cst_77 = arith.constant dense<0.000000e+00> : vector<64xf32>
      %264 = vector.multi_reduction <add>, %263, %cst_77 [0] : vector<16x64xf32> to vector<64xf32>
      %265 = vector.shape_cast %264 : vector<64xf32> to vector<1x64xf32>
      %266 = tpu.concatenate %153, %169, %185, %201, %217, %233, %249, %265 in 0 : vector<1x64xf32>, vector<1x64xf32>, vector<1x64xf32>, vector<1x64xf32>, vector<1x64xf32>, vector<1x64xf32>, vector<1x64xf32>, vector<1x64xf32> -> vector<8x64xf32>
      %267 = arith.index_cast %126 : i32 to index
      %c0_78 = arith.constant 0 : index
      %268 = vector.load %arg17[%267, %c0_78] : memref<16x64xf32, #tpu.memory_space<vmem>>, vector<8x64xf32>
      tpu.vector_store %arg17[%267, %c0_78], %266 {strides = array<i32>} : memref<16x64xf32, #tpu.memory_space<vmem>>, vector<8x64xf32>,
      scf.yield %260 : vector<16x64xf32>
    }
    %c2_i32_46 = arith.constant 2 : i32
    %c0_47 = arith.constant 0 : index
    %c0_48 = arith.constant 0 : index
    %c0_49 = arith.constant 0 : index
    %102 = vector.load %arg1[%c0_47, %c0_48, %c0_49] : memref<1x16x32xbf16, #tpu.memory_space<vmem>>, vector<1x16x32xbf16>
    %103 = vector.shape_cast %102 : vector<1x16x32xbf16> to vector<16x32xbf16>
    %c0_50 = arith.constant 0 : index
    %c0_51 = arith.constant 0 : index
    %104 = vector.load %arg3[%c0_50, %c0_51] : memref<32x64xbf16, #tpu.memory_space<vmem>>, vector<32x64xbf16>
    %cst_52 = arith.constant dense<0.000000e+00> : vector<16x64xf32>
    %105 = tpu.matmul %103, %104, %cst_52 {dimension_numbers = #tpu.dot_dimension_numbers<[1], [0], [0], [1], [0, 0, 1, 1], [], []>} : vector<16x32xbf16>, vector<32x64xbf16>, vector<16x64xf32> -> vector<16x64xf32>
    %c0_53 = arith.constant 0 : index
    %c0_54 = arith.constant 0 : index
    %106 = vector.load %arg17[%c0_53, %c0_54] : memref<16x64xf32, #tpu.memory_space<vmem>>, vector<16x64xf32>
    %c0_55 = arith.constant 0 : index
    %c0_56 = arith.constant 0 : index
    %107 = vector.load %arg12[%c0_55, %c0_56] : memref<1x64xf32, #tpu.memory_space<vmem>>, vector<1x64xf32>
    %c0_57 = arith.constant 0 : index
    %c0_58 = arith.constant 0 : index
    %108 = vector.load %arg15[%c0_57, %c0_58] : memref<16x64xf32, #tpu.memory_space<vmem>>, vector<16x64xf32>
    %109 = vector.broadcast %107 : vector<1x64xf32> to vector<16x64xf32>
    %110 = arith.mulf %109, %108 : vector<16x64xf32>
    %111 = arith.addf %106, %110 : vector<16x64xf32>
    %112 = arith.negf %105 : vector<16x64xf32>
    %113 = math.exp %112 : vector<16x64xf32>
    %cst_59 = arith.constant 1.000000e+00 : f32
    %114 = vector.broadcast %cst_59 : f32 to vector<16x64xf32>
    %115 = arith.addf %114, %113 : vector<16x64xf32>
    %116 = arith.divf %114, %115 : vector<16x64xf32>
    %117 = arith.mulf %105, %116 : vector<16x64xf32>
    %118 = arith.mulf %111, %117 : vector<16x64xf32>
    %119 = arith.truncf %118 : vector<16x64xf32> to vector<16x64xbf16>
    %c0_60 = arith.constant 0 : index
    %c0_61 = arith.constant 0 : index
    %120 = vector.load %arg13[%c0_60, %c0_61] : memref<64x128xbf16, #tpu.memory_space<vmem>>, vector<64x128xbf16>
    %cst_62 = arith.constant dense<0.000000e+00> : vector<16x128xf32>
    %121 = tpu.matmul %119, %120, %cst_62 {dimension_numbers = #tpu.dot_dimension_numbers<[1], [0], [0], [1], [0, 0, 1, 1], [], []>} : vector<16x64xbf16>, vector<64x128xbf16>, vector<16x128xf32> -> vector<16x128xf32>
    %c0_63 = arith.constant 0 : index
    %c0_64 = arith.constant 0 : index
    %c0_65 = arith.constant 0 : index
    %122 = vector.load %arg14[%c0_63, %c0_64, %c0_65] : memref<1x16x128xf32, #tpu.memory_space<vmem>>, vector<1x16x128xf32>
    %123 = vector.shape_cast %122 : vector<1x16x128xf32> to vector<16x128xf32>
    %124 = vector.shape_cast %121 : vector<16x128xf32> to vector<1x16x128xf32>
    tpu.vector_store %arg14[%c0_63, %c0_64, %c0_65], %124 {strides = array<i32>} : memref<1x16x128xf32, #tpu.memory_space<vmem>>, vector<1x16x128xf32>,
    return
  }
  func.func @transform_0(%arg0: i32) -> (i32, i32, i32) {
    %c0_i32 = arith.constant 0 : i32
    %c0_i32_0 = arith.constant 0 : i32
    %c0_i32_1 = arith.constant 0 : i32
    return %arg0, %c0_i32, %c0_i32_0 : i32, i32, i32
  }
  func.func @transform_1(%arg0: i32) -> (i32, i32) {
    %c0_i32 = arith.constant 0 : i32
    %c0_i32_0 = arith.constant 0 : i32
    %c0_i32_1 = arith.constant 0 : i32
    return %c0_i32, %c0_i32_0 : i32, i32
  }
  func.func @transform_2(%arg0: i32) -> (i32, i32) {
    %c0_i32 = arith.constant 0 : i32
    %c0_i32_0 = arith.constant 0 : i32
    %c0_i32_1 = arith.constant 0 : i32
    return %c0_i32, %c0_i32_0 : i32, i32
  }
  func.func @transform_3(%arg0: i32) -> (i32, i32) {
    %c0_i32 = arith.constant 0 : i32
    %c0_i32_0 = arith.constant 0 : i32
    %c0_i32_1 = arith.constant 0 : i32
    return %c0_i32, %c0_i32_0 : i32, i32
  }
  func.func @transform_4(%arg0: i32) -> (i32, i32) {
    %c0_i32 = arith.constant 0 : i32
    %c0_i32_0 = arith.constant 0 : i32
    %c0_i32_1 = arith.constant 0 : i32
    return %c0_i32, %c0_i32_0 : i32, i32
  }
  func.func @transform_5(%arg0: i32) -> (i32, i32) {
    %c0_i32 = arith.constant 0 : i32
    %c0_i32_0 = arith.constant 0 : i32
    %c0_i32_1 = arith.constant 0 : i32
    return %c0_i32, %c0_i32_0 : i32, i32
  }
  func.func @transform_6(%arg0: i32) -> (i32, i32) {
    %c0_i32 = arith.constant 0 : i32
    %c0_i32_0 = arith.constant 0 : i32
    %c0_i32_1 = arith.constant 0 : i32
    return %c0_i32, %c0_i32_0 : i32, i32
  }
  func.func @transform_7(%arg0: i32) -> (i32, i32) {
    %c0_i32 = arith.constant 0 : i32
    %c0_i32_0 = arith.constant 0 : i32
    %c0_i32_1 = arith.constant 0 : i32
    return %c0_i32, %c0_i32_0 : i32, i32
  }
  func.func @transform_8(%arg0: i32) -> (i32, i32) {
    %c0_i32 = arith.constant 0 : i32
    %c0_i32_0 = arith.constant 0 : i32
    %c0_i32_1 = arith.constant 0 : i32
    return %c0_i32, %c0_i32_0 : i32, i32
  }
  func.func @transform_9(%arg0: i32) -> (i32, i32) {
    %c0_i32 = arith.constant 0 : i32
    %c0_i32_0 = arith.constant 0 : i32
    %c0_i32_1 = arith.constant 0 : i32
    return %c0_i32, %c0_i32_0 : i32, i32
  }
  func.func @transform_10(%arg0: i32) -> (i32, i32) {
    %c0_i32 = arith.constant 0 : i32
    %c0_i32_0 = arith.constant 0 : i32
    %c0_i32_1 = arith.constant 0 : i32
    return %c0_i32, %c0_i32_0 : i32, i32
  }
  func.func @transform_11(%arg0: i32) -> (i32, i32) {
    %c0_i32 = arith.constant 0 : i32
    %c0_i32_0 = arith.constant 0 : i32
    %c0_i32_1 = arith.constant 0 : i32
    return %c0_i32, %c0_i32_0 : i32, i32
  }
  func.func @transform_12(%arg0: i32) -> (i32, i32) {
    %c0_i32 = arith.constant 0 : i32
    %c0_i32_0 = arith.constant 0 : i32
    %c0_i32_1 = arith.constant 0 : i32
    return %c0_i32, %c0_i32_0 : i32, i32
  }
  func.func @transform_13(%arg0: i32) -> (i32, i32, i32) {
    %c0_i32 = arith.constant 0 : i32
    %c0_i32_0 = arith.constant 0 : i32
    %c0_i32_1 = arith.constant 0 : i32
    return %arg0, %c0_i32, %c0_i32_0 : i32, i32, i32
  }
}

</mosaic_0001>

<llo_original>
// kernel: tpu_custom_call.1
$region0: #{tpu_custom_call.1}
  #allocation0 [shape = 'u32[]', space=smem, size = 0x4, offset = 0x4, fixed_abs, tag = 'smem constant byte address 0x4 - core index']
  #allocation1 [shape = 'u32[72,128]{1,0:T(1,128)}', space=vmem, size = 0x9000, scoped, tag = 'internal scratch']
  #allocation2 [shape = 'f32[16,64]{1,0:T(8,128)}', space=vmem, size = 0x2000, scoped, tag = 'scratch operand']
  #allocation3 [shape = 'f32[16,64]{1,0:T(8,128)}', space=vmem, size = 0x2000, scoped, tag = 'scratch operand']
  #allocation4 [shape = 'f32[16,64]{1,0:T(8,128)}', space=vmem, size = 0x2000, scoped, tag = 'scratch operand']
  #allocation5 [shape = 'f32[16,16]{1,0:T(8,128)}', space=vmem, size = 0x2000, scoped, tag = 'scratch operand']
  #allocation6 [shape = 'f32[16,16]{1,0:T(8,128)}', space=vmem, size = 0x2000, scoped, tag = 'scratch operand']
  %s0 = inlined_call_operand.vmem [shape: bf16[2,16,32], index: 0, kind: input, shape index: {}]
  %s1 = inlined_call_operand.vmem [shape: bf16[32,64], index: 1, kind: input, shape index: {}]
  %s2 = inlined_call_operand.vmem [shape: bf16[32,64], index: 2, kind: input, shape index: {}]
  %s3 = inlined_call_operand.vmem [shape: f32[4,64], index: 3, kind: input, shape index: {}]
  %s4 = inlined_call_operand.vmem [shape: f32[1,64], index: 4, kind: input, shape index: {}]
  %s5 = inlined_call_operand.vmem [shape: f32[64,2], index: 5, kind: input, shape index: {}]
  %s6 = inlined_call_operand.vmem [shape: bf16[64,16], index: 6, kind: input, shape index: {}]
  %s7 = inlined_call_operand.vmem [shape: bf16[64,16], index: 7, kind: input, shape index: {}]
  %s8 = inlined_call_operand.vmem [shape: f32[2,64], index: 8, kind: input, shape index: {}]
  %s9 = inlined_call_operand.vmem [shape: f32[1,64], index: 9, kind: input, shape index: {}]
  %s10 = inlined_call_operand.vmem [shape: f32[16,64], index: 10, kind: input, shape index: {}]
  %s11 = inlined_call_operand.vmem [shape: f32[1,64], index: 11, kind: input, shape index: {}]
  %s12 = inlined_call_operand.vmem [shape: bf16[64,128], index: 12, kind: input, shape index: {}]
  %s13 = inlined_call_operand.hbm [shape: f32[2,16,128], index: 13, kind: output, shape index: {}]
  %s14 = sld [smem:[#allocation0]]
  $region92: #{tpu_custom_call.1} parent=0
    _
  %s16 = ssub.s32 1, %s14
  %s17 = scalar_select 0, %s16, %s14
  $region1: #{tpu_custom_call.1} parent=0
    #allocation7 [shape = 'u8[16384]{0}', space=vmem, size = 0x4000, scoped, tag = 'output window, operand 0']
    #allocation8 [shape = 's32[2]{0}', space=sflag, size = 0x8, scoped, tag = 'scoped memory for tpu_custom_call.1']
    %18 = vsyncpa [#allocation8], 0
    %s19 = scalar_lea.sflag [#allocation8], 1
    %20 = vsyncpa %s19, 0
    loop: start=0, step=1, limit=4
    $region2: #{tpu_custom_call.1} parent=1 // loop_pre_header
      _
    $region3: #{tpu_custom_call.1} parent=1 // loop_header
      %s22 = sphi 0, %s26
      %p23 = scmp.ge.s32.totalorder %s22, 4
      %s32 = sphi 0, %s34
      %s35 = sphi 0, %s32
      %s36 = sphi 0, %s35
      %s52 = sphi 0, %s36
      %s56 = sphi 0, %s56
      %s58 = sphi 0, %s56
      %s59 = sphi 0, %s58
      %s73 = sphi 0, %s59
      %s77 = sphi 0, %s77
      %s79 = sphi 0, %s77
      %s80 = sphi 0, %s79
      %s94 = sphi 0, %s80
      %s98 = sphi 0, %s98
      %s100 = sphi 0, %s98
      %s101 = sphi 0, %s100
      %s115 = sphi 0, %s101
      %s119 = sphi 0, %s119
      %s121 = sphi 0, %s119
      %s122 = sphi 0, %s121
      %s136 = sphi 0, %s122
      %s140 = sphi 0, %s140
      %s142 = sphi 0, %s140
      %s143 = sphi 0, %s142
      %s157 = sphi 0, %s143
      %s161 = sphi 0, %s161
      %s163 = sphi 0, %s161
      %s164 = sphi 0, %s163
      %s178 = sphi 0, %s164
      %s182 = sphi 0, %s182
      %s184 = sphi 0, %s182
      %s185 = sphi 0, %s184
      %s199 = sphi 0, %s185
      %s203 = sphi 0, %s203
      %s205 = sphi 0, %s203
      %s206 = sphi 0, %s205
      %s220 = sphi 0, %s206
      %s224 = sphi 0, %s224
      %s226 = sphi 0, %s224
      %s227 = sphi 0, %s226
      %s241 = sphi 0, %s227
      %s245 = sphi 0, %s245
      %s247 = sphi 0, %s245
      %s248 = sphi 0, %s247
      %s262 = sphi 0, %s248
      %s266 = sphi 0, %s266
      %s268 = sphi 0, %s266
      %s269 = sphi 0, %s268
      %s283 = sphi 0, %s269
      %s287 = sphi 0, %s287
      %s289 = sphi 0, %s287
      %s290 = sphi 0, %s289
      %s304 = sphi 0, %s290
      %s310 = sphi 0, %s312
      %s313 = sphi 0, %s310
      %s314 = sphi 0, %s313
      %s330 = sphi 0, %s314
    $region4: #{tpu_custom_call.1} parent=1 // loop_header_branch
      %25 = sbr.rel (%p23) target = $region8
    $region5: #{tpu_custom_call.1} parent=1 // loop_body
      %s27 = ssub.s32 %s22, 1
      %s28 = ssub.s32 %s22, 2
      %s29 = sadd.s32 %s22, 1
      %s30 = ssub.s32 %s22, %s29
      %p31 = scmp.eq.s32.totalorder %s30, 0
      %s33 = sadd.s32 %s32, 1
      %s34 = scalar_select %p31, %s32, %s33
      %p37 = pneg %p31
      %p38 = scmp.eq.s32.totalorder %s22, 1
      %p39 = por %p37, %p38
      %p40 = scmp.ne.s32.totalorder %s32, %s35
      %p41 = scmp.eq.s32.totalorder %s22, 0
      %p42 = por %p40, %p41
      %p43 = scmp.ne.s32.totalorder %s32, %s35
      %p44 = scmp.eq.s32.totalorder %s27, 1
      %p45 = por %p43, %p44
      %p46 = scmp.ne.s32.totalorder %s35, %s36
      %p47 = scmp.eq.s32.totalorder %s27, 0
      %p48 = por %p46, %p47
      %p49 = scmp.ne.s32.totalorder %s35, %s36
      %p50 = scmp.eq.s32.totalorder %s28, 1
      %p51 = por %p49, %p50
      %p53 = scmp.ne.s32.totalorder %s36, %s52
      %p54 = scmp.eq.s32.totalorder %s28, 0
      %p55 = por %p53, %p54
      %s57 = sadd.s32 %s56, 1
      %p60 = scmp.eq.s32.totalorder %s22, 1
      %p61 = scmp.ne.s32.totalorder %s56, %s58
      %p62 = scmp.eq.s32.totalorder %s22, 0
      %p63 = por %p61, %p62
      %p64 = scmp.ne.s32.totalorder %s56, %s58
      %p65 = scmp.eq.s32.totalorder %s27, 1
      %p66 = por %p64, %p65
      %p67 = scmp.ne.s32.totalorder %s58, %s59
      %p68 = scmp.eq.s32.totalorder %s27, 0
      %p69 = por %p67, %p68
      %p70 = scmp.ne.s32.totalorder %s58, %s59
      %p71 = scmp.eq.s32.totalorder %s28, 1
      %p72 = por %p70, %p71
      %p74 = scmp.ne.s32.totalorder %s59, %s73
      %p75 = scmp.eq.s32.totalorder %s28, 0
      %p76 = por %p74, %p75
      %s78 = sadd.s32 %s77, 1
      %p81 = scmp.eq.s32.totalorder %s22, 1
      %p82 = scmp.ne.s32.totalorder %s77, %s79
      %p83 = scmp.eq.s32.totalorder %s22, 0
      %p84 = por %p82, %p83
      %p85 = scmp.ne.s32.totalorder %s77, %s79
      %p86 = scmp.eq.s32.totalorder %s27, 1
      %p87 = por %p85, %p86
      %p88 = scmp.ne.s32.totalorder %s79, %s80
      %p89 = scmp.eq.s32.totalorder %s27, 0
      %p90 = por %p88, %p89
      %p91 = scmp.ne.s32.totalorder %s79, %s80
      %p92 = scmp.eq.s32.totalorder %s28, 1
      %p93 = por %p91, %p92
      %p95 = scmp.ne.s32.totalorder %s80, %s94
      %p96 = scmp.eq.s32.totalorder %s28, 0
      %p97 = por %p95, %p96
      %s99 = sadd.s32 %s98, 1
      %p102 = scmp.eq.s32.totalorder %s22, 1
      %p103 = scmp.ne.s32.totalorder %s98, %s100
      %p104 = scmp.eq.s32.totalorder %s22, 0
      %p105 = por %p103, %p104
      %p106 = scmp.ne.s32.totalorder %s98, %s100
      %p107 = scmp.eq.s32.totalorder %s27, 1
      %p108 = por %p106, %p107
      %p109 = scmp.ne.s32.totalorder %s100, %s101
      %p110 = scmp.eq.s32.totalorder %s27, 0
      %p111 = por %p109, %p110
      %p112 = scmp.ne.s32.totalorder %s100, %s101
      %p113 = scmp.eq.s32.totalorder %s28, 1
      %p114 = por %p112, %p113
      %p116 = scmp.ne.s32.totalorder %s101, %s115
      %p117 = scmp.eq.s32.totalorder %s28, 0
      %p118 = por %p116, %p117
      %s120 = sadd.s32 %s119, 1
      %p123 = scmp.eq.s32.totalorder %s22, 1
      %p124 = scmp.ne.s32.totalorder %s119, %s121
      %p125 = scmp.eq.s32.totalorder %s22, 0
      %p126 = por %p124, %p125
      %p127 = scmp.ne.s32.totalorder %s119, %s121
      %p128 = scmp.eq.s32.totalorder %s27, 1
      %p129 = por %p127, %p128
      %p130 = scmp.ne.s32.totalorder %s121, %s122
      %p131 = scmp.eq.s32.totalorder %s27, 0
      %p132 = por %p130, %p131
      %p133 = scmp.ne.s32.totalorder %s121, %s122
      %p134 = scmp.eq.s32.totalorder %s28, 1
      %p135 = por %p133, %p134
      %p137 = scmp.ne.s32.totalorder %s122, %s136
      %p138 = scmp.eq.s32.totalorder %s28, 0
      %p139 = por %p137, %p138
      %s141 = sadd.s32 %s140, 1
      %p144 = scmp.eq.s32.totalorder %s22, 1
      %p145 = scmp.ne.s32.totalorder %s140, %s142
      %p146 = scmp.eq.s32.totalorder %s22, 0
      %p147 = por %p145, %p146
      %p148 = scmp.ne.s32.totalorder %s140, %s142
      %p149 = scmp.eq.s32.totalorder %s27, 1
      %p150 = por %p148, %p149
      %p151 = scmp.ne.s32.totalorder %s142, %s143
      %p152 = scmp.eq.s32.totalorder %s27, 0
      %p153 = por %p151, %p152
      %p154 = scmp.ne.s32.totalorder %s142, %s143
      %p155 = scmp.eq.s32.totalorder %s28, 1
      %p156 = por %p154, %p155
      %p158 = scmp.ne.s32.totalorder %s143, %s157
      %p159 = scmp.eq.s32.totalorder %s28, 0
      %p160 = por %p158, %p159
      %s162 = sadd.s32 %s161, 1
      %p165 = scmp.eq.s32.totalorder %s22, 1
      %p166 = scmp.ne.s32.totalorder %s161, %s163
      %p167 = scmp.eq.s32.totalorder %s22, 0
      %p168 = por %p166, %p167
      %p169 = scmp.ne.s32.totalorder %s161, %s163
      %p170 = scmp.eq.s32.totalorder %s27, 1
      %p171 = por %p169, %p170
      %p172 = scmp.ne.s32.totalorder %s163, %s164
      %p173 = scmp.eq.s32.totalorder %s27, 0
      %p174 = por %p172, %p173
      %p175 = scmp.ne.s32.totalorder %s163, %s164
      %p176 = scmp.eq.s32.totalorder %s28, 1
      %p177 = por %p175, %p176
      %p179 = scmp.ne.s32.totalorder %s164, %s178
      %p180 = scmp.eq.s32.totalorder %s28, 0
      %p181 = por %p179, %p180
      %s183 = sadd.s32 %s182, 1
      %p186 = scmp.eq.s32.totalorder %s22, 1
      %p187 = scmp.ne.s32.totalorder %s182, %s184
      %p188 = scmp.eq.s32.totalorder %s22, 0
      %p189 = por %p187, %p188
      %p190 = scmp.ne.s32.totalorder %s182, %s184
      %p191 = scmp.eq.s32.totalorder %s27, 1
      %p192 = por %p190, %p191
      %p193 = scmp.ne.s32.totalorder %s184, %s185
      %p194 = scmp.eq.s32.totalorder %s27, 0
      %p195 = por %p193, %p194
      %p196 = scmp.ne.s32.totalorder %s184, %s185
      %p197 = scmp.eq.s32.totalorder %s28, 1
      %p198 = por %p196, %p197
      %p200 = scmp.ne.s32.totalorder %s185, %s199
      %p201 = scmp.eq.s32.totalorder %s28, 0
      %p202 = por %p200, %p201
      %s204 = sadd.s32 %s203, 1
      %p207 = scmp.eq.s32.totalorder %s22, 1
      %p208 = scmp.ne.s32.totalorder %s203, %s205
      %p209 = scmp.eq.s32.totalorder %s22, 0
      %p210 = por %p208, %p209
      %p211 = scmp.ne.s32.totalorder %s203, %s205
      %p212 = scmp.eq.s32.totalorder %s27, 1
      %p213 = por %p211, %p212
      %p214 = scmp.ne.s32.totalorder %s205, %s206
      %p215 = scmp.eq.s32.totalorder %s27, 0
      %p216 = por %p214, %p215
      %p217 = scmp.ne.s32.totalorder %s205, %s206
      %p218 = scmp.eq.s32.totalorder %s28, 1
      %p219 = por %p217, %p218
      %p221 = scmp.ne.s32.totalorder %s206, %s220
      %p222 = scmp.eq.s32.totalorder %s28, 0
      %p223 = por %p221, %p222
      %s225 = sadd.s32 %s224, 1
      %p228 = scmp.eq.s32.totalorder %s22, 1
      %p229 = scmp.ne.s32.totalorder %s224, %s226
      %p230 = scmp.eq.s32.totalorder %s22, 0
      %p231 = por %p229, %p230
      %p232 = scmp.ne.s32.totalorder %s224, %s226
      %p233 = scmp.eq.s32.totalorder %s27, 1
      %p234 = por %p232, %p233
      %p235 = scmp.ne.s32.totalorder %s226, %s227
      %p236 = scmp.eq.s32.totalorder %s27, 0
      %p237 = por %p235, %p236
      %p238 = scmp.ne.s32.totalorder %s226, %s227
      %p239 = scmp.eq.s32.totalorder %s28, 1
      %p240 = por %p238, %p239
      %p242 = scmp.ne.s32.totalorder %s227, %s241
      %p243 = scmp.eq.s32.totalorder %s28, 0
      %p244 = por %p242, %p243
      %s246 = sadd.s32 %s245, 1
      %p249 = scmp.eq.s32.totalorder %s22, 1
      %p250 = scmp.ne.s32.totalorder %s245, %s247
      %p251 = scmp.eq.s32.totalorder %s22, 0
      %p252 = por %p250, %p251
      %p253 = scmp.ne.s32.totalorder %s245, %s247
      %p254 = scmp.eq.s32.totalorder %s27, 1
      %p255 = por %p253, %p254
      %p256 = scmp.ne.s32.totalorder %s247, %s248
      %p257 = scmp.eq.s32.totalorder %s27, 0
      %p258 = por %p256, %p257
      %p259 = scmp.ne.s32.totalorder %s247, %s248
      %p260 = scmp.eq.s32.totalorder %s28, 1
      %p261 = por %p259, %p260
      %p263 = scmp.ne.s32.totalorder %s248, %s262
      %p264 = scmp.eq.s32.totalorder %s28, 0
      %p265 = por %p263, %p264
      %s267 = sadd.s32 %s266, 1
      %p270 = scmp.eq.s32.totalorder %s22, 1
      %p271 = scmp.ne.s32.totalorder %s266, %s268
      %p272 = scmp.eq.s32.totalorder %s22, 0
      %p273 = por %p271, %p272
      %p274 = scmp.ne.s32.totalorder %s266, %s268
      %p275 = scmp.eq.s32.totalorder %s27, 1
      %p276 = por %p274, %p275
      %p277 = scmp.ne.s32.totalorder %s268, %s269
      %p278 = scmp.eq.s32.totalorder %s27, 0
      %p279 = por %p277, %p278
      %p280 = scmp.ne.s32.totalorder %s268, %s269
      %p281 = scmp.eq.s32.totalorder %s28, 1
      %p282 = por %p280, %p281
      %p284 = scmp.ne.s32.totalorder %s269, %s283
      %p285 = scmp.eq.s32.totalorder %s28, 0
      %p286 = por %p284, %p285
      %s288 = sadd.s32 %s287, 1
      %p291 = scmp.eq.s32.totalorder %s22, 1
      %p292 = scmp.ne.s32.totalorder %s287, %s289
      %p293 = scmp.eq.s32.totalorder %s22, 0
      %p294 = por %p292, %p293
      %p295 = scmp.ne.s32.totalorder %s287, %s289
      %p296 = scmp.eq.s32.totalorder %s27, 1
      %p297 = por %p295, %p296
      %p298 = scmp.ne.s32.totalorder %s289, %s290
      %p299 = scmp.eq.s32.totalorder %s27, 0
      %p300 = por %p298, %p299
      %p301 = scmp.ne.s32.totalorder %s289, %s290
      %p302 = scmp.eq.s32.totalorder %s28, 1
      %p303 = por %p301, %p302
      %p305 = scmp.ne.s32.totalorder %s290, %s304
      %p306 = scmp.eq.s32.totalorder %s28, 0
      %p307 = por %p305, %p306
      %s308 = ssub.s32 %s22, %s29
      %p309 = scmp.eq.s32.totalorder %s308, 0
      %s311 = sadd.s32 %s310, 1
      %s312 = scalar_select %p309, %s310, %s311
      %p315 = pneg %p309
      %p316 = scmp.eq.s32.totalorder %s22, 1
      %p317 = por %p315, %p316
      %p318 = scmp.ne.s32.totalorder %s310, %s313
      %p319 = scmp.eq.s32.totalorder %s22, 0
      %p320 = por %p318, %p319
      %p321 = scmp.ne.s32.totalorder %s310, %s313
      %p322 = scmp.eq.s32.totalorder %s27, 1
      %p323 = por %p321, %p322
      %p324 = scmp.ne.s32.totalorder %s313, %s314
      %p325 = scmp.eq.s32.totalorder %s27, 0
      %p326 = por %p324, %p325
      %p327 = scmp.ne.s32.totalorder %s313, %s314
      %p328 = scmp.eq.s32.totalorder %s28, 1
      %p329 = por %p327, %p328
      %p331 = scmp.ne.s32.totalorder %s314, %s330
      %p332 = scmp.eq.s32.totalorder %s28, 0
      %p333 = por %p331, %p332
      %p334 = scmp.le.s32.totalorder 1, %s22
      %p335 = scmp.lt.s32.totalorder %s22, 3
      %p336 = pnand %p334, %p335
      %p337 = pneg %p336
      // Predicated region
      $region9: #{tpu_custom_call.1} parent=5 // pred_check
        _
      $region10: #{tpu_custom_call.1} parent=5 // pred_check_branch
        %339 = sbr.rel (%p336) target = $region12
      $region11: #{tpu_custom_call.1} parent=5 // pred_region
        %s340 = ssub.s32 %s22, 1
        // Predicated region
        $region13: #{tpu_custom_call.1} parent=11 // pred_check
          %p341 = pneg %p69
        $region14: #{tpu_custom_call.1} parent=11 // pred_check_branch
          %343 = sbr.rel (%p341) target = $region16
        $region15: #{tpu_custom_call.1} parent=11 // pred_region
          _
        $region16: #{tpu_custom_call.1} parent=11 // pred_fallthru
          _
        // Predicated region
        $region17: #{tpu_custom_call.1} parent=11 // pred_check
          %p344 = pneg %p90
        $region18: #{tpu_custom_call.1} parent=11 // pred_check_branch
          %346 = sbr.rel (%p344) target = $region20
        $region19: #{tpu_custom_call.1} parent=11 // pred_region
          _
        $region20: #{tpu_custom_call.1} parent=11 // pred_fallthru
          _
        // Predicated region
        $region21: #{tpu_custom_call.1} parent=11 // pred_check
          %p347 = pneg %p111
        $region22: #{tpu_custom_call.1} parent=11 // pred_check_branch
          %349 = sbr.rel (%p347) target = $region24
        $region23: #{tpu_custom_call.1} parent=11 // pred_region
          _
        $region24: #{tpu_custom_call.1} parent=11 // pred_fallthru
          _
        // Predicated region
        $region25: #{tpu_custom_call.1} parent=11 // pred_check
          %p350 = pneg %p132
        $region26: #{tpu_custom_call.1} parent=11 // pred_check_branch
          %352 = sbr.rel (%p350) target = $region28
        $region27: #{tpu_custom_call.1} parent=11 // pred_region
          _
        $region28: #{tpu_custom_call.1} parent=11 // pred_fallthru
          _
        // Predicated region
        $region29: #{tpu_custom_call.1} parent=11 // pred_check
          %p353 = pneg %p153
        $region30: #{tpu_custom_call.1} parent=11 // pred_check_branch
          %355 = sbr.rel (%p353) target = $region32
        $region31: #{tpu_custom_call.1} parent=11 // pred_region
          _
        $region32: #{tpu_custom_call.1} parent=11 // pred_fallthru
          _
        // Predicated region
        $region33: #{tpu_custom_call.1} parent=11 // pred_check
          %p356 = pneg %p174
        $region34: #{tpu_custom_call.1} parent=11 // pred_check_branch
          %358 = sbr.rel (%p356) target = $region36
        $region35: #{tpu_custom_call.1} parent=11 // pred_region
          _
        $region36: #{tpu_custom_call.1} parent=11 // pred_fallthru
          _
        // Predicated region
        $region37: #{tpu_custom_call.1} parent=11 // pred_check
          %p359 = pneg %p195
        $region38: #{tpu_custom_call.1} parent=11 // pred_check_branch
          %361 = sbr.rel (%p359) target = $region40
        $region39: #{tpu_custom_call.1} parent=11 // pred_region
          _
        $region40: #{tpu_custom_call.1} parent=11 // pred_fallthru
          _
        // Predicated region
        $region41: #{tpu_custom_call.1} parent=11 // pred_check
          %p362 = pneg %p216
        $region42: #{tpu_custom_call.1} parent=11 // pred_check_branch
          %364 = sbr.rel (%p362) target = $region44
        $region43: #{tpu_custom_call.1} parent=11 // pred_region
          _
        $region44: #{tpu_custom_call.1} parent=11 // pred_fallthru
          _
        // Predicated region
        $region45: #{tpu_custom_call.1} parent=11 // pred_check
          %p365 = pneg %p237
        $region46: #{tpu_custom_call.1} parent=11 // pred_check_branch
          %367 = sbr.rel (%p365) target = $region48
        $region47: #{tpu_custom_call.1} parent=11 // pred_region
          _
        $region48: #{tpu_custom_call.1} parent=11 // pred_fallthru
          _
        // Predicated region
        $region49: #{tpu_custom_call.1} parent=11 // pred_check
          %p368 = pneg %p258
        $region50: #{tpu_custom_call.1} parent=11 // pred_check_branch
          %370 = sbr.rel (%p368) target = $region52
        $region51: #{tpu_custom_call.1} parent=11 // pred_region
          _
        $region52: #{tpu_custom_call.1} parent=11 // pred_fallthru
          _
        // Predicated region
        $region53: #{tpu_custom_call.1} parent=11 // pred_check
          %p371 = pneg %p279
        $region54: #{tpu_custom_call.1} parent=11 // pred_check_branch
          %373 = sbr.rel (%p371) target = $region56
        $region55: #{tpu_custom_call.1} parent=11 // pred_region
          _
        $region56: #{tpu_custom_call.1} parent=11 // pred_fallthru
          _
        // Predicated region
        $region57: #{tpu_custom_call.1} parent=11 // pred_check
          %p374 = pneg %p300
        $region58: #{tpu_custom_call.1} parent=11 // pred_check_branch
          %376 = sbr.rel (%p374) target = $region60
        $region59: #{tpu_custom_call.1} parent=11 // pred_region
          _
        $region60: #{tpu_custom_call.1} parent=11 // pred_fallthru
          _
      $region12: #{tpu_custom_call.1} parent=5 // pred_fallthru
        _
      %p377 = scmp.lt.s32.totalorder %s22, 2
      // Predicated region
      $region61: #{tpu_custom_call.1} parent=5 // pred_check
        %p378 = pneg %p377
      $region62: #{tpu_custom_call.1} parent=5 // pred_check_branch
        %380 = sbr.rel (%p378) target = $region64
      $region63: #{tpu_custom_call.1} parent=5 // pred_region
        // Predicated region
        $region65: #{tpu_custom_call.1} parent=63 // pred_check
          %p381 = pneg %p42
        $region66: #{tpu_custom_call.1} parent=63 // pred_check_branch
          %383 = sbr.rel (%p381) target = $region68
        $region67: #{tpu_custom_call.1} parent=63 // pred_region
          %p384 = scmp.lt.s32.totalorder %s22, 1
          %s385 = scalar_select %p384, %s22, 1
          %s386 = smul.addr %s385, 2
          %s387 = smul.addr %s386, 4
          %s388 = scalar_lea.vmem %s0, %s387
        $region68: #{tpu_custom_call.1} parent=63 // pred_fallthru
          _
      $region64: #{tpu_custom_call.1} parent=5 // pred_fallthru
        _
      %p389 = scmp.le.s32.totalorder 1, %s22
      %p390 = scmp.lt.s32.totalorder %s22, 3
      %p391 = pnand %p389, %p390
      %p392 = pneg %p391
      // Predicated region
      $region69: #{tpu_custom_call.1} parent=5 // pred_check
        _
      $region70: #{tpu_custom_call.1} parent=5 // pred_check_branch
        %394 = sbr.rel (%p391) target = $region72
      $region71: #{tpu_custom_call.1} parent=5 // pred_region
        %s395 = ssub.s32 %s22, 1
        %p396 = scmp.lt.s32.totalorder %s27, 1
        %s397 = scalar_select %p396, %s27, 1
        %s398 = smul.addr %s397, 2
        %s399 = smul.addr %s398, 4
        %s400 = scalar_lea.vmem %s0, %s399
        %p401 = pneg %p48
        %p402 = pneg %p45
        %p403 = pneg %p69
        %p404 = pneg %p66
        %p405 = pneg %p90
        %p406 = pneg %p87
        %p407 = pneg %p111
        %p408 = pneg %p108
        %p409 = pneg %p132
        %p410 = pneg %p129
        %p411 = pneg %p153
        %p412 = pneg %p150
        %p413 = pneg %p174
        %p414 = pneg %p171
        %p415 = pneg %p195
        %p416 = pneg %p192
        %p417 = pneg %p216
        %p418 = pneg %p213
        %p419 = pneg %p237
        %p420 = pneg %p234
        %p421 = pneg %p258
        %p422 = pneg %p255
        %p423 = pneg %p279
        %p424 = pneg %p276
        %p425 = pneg %p300
        %p426 = pneg %p297
        %p427 = pneg %p326
        %p428 = pneg %p323
        %s429 = sand.u32 %s313, 1
        %s430 = scalar_lea.sflag [#allocation8], %s429
        %s431 = sand.u32 %s313, 1
        %s432 = smul.addr %s431, 16
        %s433 = scalar_lea.vmem [#allocation7], %s432
        %p434 = scmp.lt.s32.totalorder %s27, 1
        %s435 = scalar_select %p434, %s27, 1
        %s436 = smul.addr %s435, 2
        %s437 = smul.addr %s436, 4
        %s438 = scalar_lea.vmem %s0, %s437
        %v440 = vld [vmem:[%s438] sm:$0xf]
        %v441 = vld [vmem:[%s438 + $0x4] sm:$0xf]
        %v442 = vld [vmem:[%s1] sm:$0xf]
        %v443 = vld [vmem:[%s1 + $0x4] sm:$0xf]
        %v444 = vld [vmem:[%s1 + $0x8] sm:$0xf]
        %v445 = vld [vmem:[%s1 + $0xc] sm:$0xf]
        %v448 = vunpack.c.l.b16 %v440
        %v449 = vunpack.c.l.b16 %v441
        %v450 = vpack.c.b16 %v449, %v448
        %v455 = vunpack.c.l.b16 %v442
        %v456 = vunpack.c.l.b16 %v443
        %v457 = vunpack.c.l.b16 %v444
        %v458 = vunpack.c.l.b16 %v445
        %v459 = vpack.c.b16 %v456, %v455
        %v460 = vpack.c.b16 %v458, %v457
        %vm463 = vcmask 261120
        %v465 = vsel %vm463, %v450, 0
        %467 = vmatpush.bf16.msra.mxu0 0
        %468 = vmatpush.bf16.msra.mxu0 0
        %469 = vmatpush.bf16.msra.mxu0 0
        %470 = vmatpush.bf16.msra.mxu0 0
        %471 = vmatpush.bf16.msra.mxu0 0
        %472 = vmatpush.bf16.msra.mxu0 0
        %473 = vmatpush.bf16.msra.mxu0 %v460
        %474 = vmatpush.bf16.msra.mxu0 %v459
        %475 = vmatmul.bf16.gmra.mxu0 %v465
        %v476 = vpop.f32.mrf.mxu0
        %v477 = vadd.f32 0.0, %v476
        %v478 = vpop.f32.mrf.mxu0
        %v479 = vadd.f32 0.0, %v478
        %480 = vdwg.mxu0
        %v481 = vld [vmem:[%s3] sm:$0xf]
        %v482 = vlaneseq
        %v483 = vshrl.u32 %v482, 7
        %v484 = vadd.s32 %v483, 8
        %v485 = vld [vmem:[%s4] sm:$0x1]
        %v487 = vperm.slane %v485, 0
        %v489 = vadd.f32 %v487, 0.0
        %v490 = vrot.slane %v477, 5
        %v491 = vrot.slane %v479, 5
        %vm492 = vcmp.lt.s32.totalorder %v483, 3
        %v493 = vsel %vm492, %v490, %v491
        %v494 = vsel %vm492, %v491, %v490
        %vm495 = vcmp.ge.s32.totalorder %v483, 3
        %vm496 = vcmp.ge.s32.totalorder %v484, 3
        %v497 = vsel %vm495, 1, 0
        %v498 = vsel %vm496, 1, 0
        %vm499 = vcmp.eq.s32.totalorder %v497, 1
        %vm500 = vcmp.eq.s32.totalorder %v498, 1
        %v501 = vsel %vm499, %v494, 0.0
        %v502 = vsel %vm500, %v493, 0.0
        %v503 = vperm.slane %v481, 0
        %v504 = vmul.f32 %v501, %v503
        %v505 = vmul.f32 %v502, %v503
        %v506 = vadd.f32 %v489, %v504
        %v507 = vadd.f32 %v489, %v505
        %v508 = vrot.slane %v477, 6
        %v509 = vrot.slane %v479, 6
        %vm510 = vcmp.lt.s32.totalorder %v483, 2
        %v511 = vsel %vm510, %v508, %v509
        %v512 = vsel %vm510, %v509, %v508
        %vm513 = vcmp.ge.s32.totalorder %v483, 2
        %vm514 = vcmp.ge.s32.totalorder %v484, 2
        %v515 = vsel %vm513, 1, 0
        %v516 = vsel %vm514, 1, 0
        %vm517 = vcmp.eq.s32.totalorder %v515, 1
        %vm518 = vcmp.eq.s32.totalorder %v516, 1
        %v519 = vsel %vm517, %v512, 0.0
        %v520 = vsel %vm518, %v511, 0.0
        %v521 = vperm.slane %v481, 1
        %v522 = vmul.f32 %v519, %v521
        %v523 = vmul.f32 %v520, %v521
        %v524 = vadd.f32 %v506, %v522
        %v525 = vadd.f32 %v507, %v523
        %v526 = vrot.slane %v477, 7
        %v527 = vrot.slane %v479, 7
        %vm528 = vcmp.lt.s32.totalorder %v483, 1
        %v529 = vsel %vm528, %v526, %v527
        %v530 = vsel %vm528, %v527, %v526
        %vm531 = vcmp.ge.s32.totalorder %v483, 1
        %vm532 = vcmp.ge.s32.totalorder %v484, 1
        %v533 = vsel %vm531, 1, 0
        %v534 = vsel %vm532, 1, 0
        %vm535 = vcmp.eq.s32.totalorder %v533, 1
        %vm536 = vcmp.eq.s32.totalorder %v534, 1
        %v537 = vsel %vm535, %v530, 0.0
        %v538 = vsel %vm536, %v529, 0.0
        %v539 = vperm.slane %v481, 2
        %v540 = vmul.f32 %v537, %v539
        %v541 = vmul.f32 %v538, %v539
        %v542 = vadd.f32 %v524, %v540
        %v543 = vadd.f32 %v525, %v541
        %v544 = vperm.slane %v481, 3
        %v545 = vmul.f32 %v477, %v544
        %v546 = vmul.f32 %v479, %v544
        %v547 = vadd.f32 %v542, %v545
        %v548 = vadd.f32 %v543, %v546
        %v549 = vxor.u32 %v547, 2147483648
        %v550 = vxor.u32 %v548, 2147483648
        %v551 = vmul.f32 %v549, 1.442695
        %v552 = vpow.pop %v551
        %v553 = vmul.f32 %v550, 1.442695
        %v554 = vpow.pop %v553
        %v555 = vadd.f32 %v552, 1.0
        %v556 = vadd.f32 %v554, 1.0
        %v557 = vrcp.pop %v555
        %v558 = vmul.f32 %v555, %v557
        %v559 = vsub.f32 1.0, %v558
        %v560 = vmul.f32 %v557, %v559
        %v561 = vadd.f32 %v557, %v560
        %vm562 = vweird.f32 %v555
        %vm563 = vweird.f32 %v557
        %vm564 = vmor %vm562, %vm563
        %v565 = vsel %vm564, %v557, %v561
        %v566 = vand.u32 2147483647, %v555
        %vm567 = vcmp.eq.f32.partialorder %v566, 8.507059e+37
        %v568 = vand.u32 %v555, 2147483648
        %v569 = vor.u32 1.1754944e-38, %v568
        %v570 = vsel %vm567, %v569, %v565
        %v571 = vmul.f32 1.0, %v570
        %v572 = vrcp.pop %v556
        %v573 = vmul.f32 %v556, %v572
        %v574 = vsub.f32 1.0, %v573
        %v575 = vmul.f32 %v572, %v574
        %v576 = vadd.f32 %v572, %v575
        %vm577 = vweird.f32 %v556
        %vm578 = vweird.f32 %v572
        %vm579 = vmor %vm577, %vm578
        %v580 = vsel %vm579, %v572, %v576
        %v581 = vand.u32 2147483647, %v556
        %vm582 = vcmp.eq.f32.partialorder %v581, 8.507059e+37
        %v583 = vand.u32 %v556, 2147483648
        %v584 = vor.u32 1.1754944e-38, %v583
        %v585 = vsel %vm582, %v584, %v580
        %v586 = vmul.f32 1.0, %v585
        %v587 = vmul.f32 %v547, %v571
        %v588 = vmul.f32 %v548, %v586
        %vm589 = vcmask 523264
        %590 = vst.msk [vmem:[#allocation2] sm:$0xff] %vm589, %v587
        %591 = vst.msk [vmem:[#allocation2 + $0x8] sm:$0xff] %vm589, %v588
        %v592 = vpack.c.bf16 %v588, %v587
        %v593 = vld [vmem:[%s6] sm:$0xf]
        %v594 = vld [vmem:[%s6 + $0x4] sm:$0xf]
        %v595 = vld [vmem:[%s6 + $0x8] sm:$0xf]
        %v596 = vld [vmem:[%s6 + $0xc] sm:$0xf]
        %v597 = vld [vmem:[%s6 + $0x10] sm:$0xf]
        %v598 = vld [vmem:[%s6 + $0x14] sm:$0xf]
        %v599 = vld [vmem:[%s6 + $0x18] sm:$0xf]
        %v600 = vld [vmem:[%s6 + $0x1c] sm:$0xf]
        %v609 = vunpack.c.l.b16 %v593
        %v610 = vunpack.c.l.b16 %v594
        %v611 = vunpack.c.l.b16 %v595
        %v612 = vunpack.c.l.b16 %v596
        %v613 = vunpack.c.l.b16 %v597
        %v614 = vunpack.c.l.b16 %v598
        %v615 = vunpack.c.l.b16 %v599
        %v616 = vunpack.c.l.b16 %v600
        %v617 = vpack.c.b16 %v610, %v609
        %v618 = vpack.c.b16 %v612, %v611
        %v619 = vpack.c.b16 %v614, %v613
        %v620 = vpack.c.b16 %v616, %v615
        %v626 = vsel %vm589, %v592, 0
        %628 = vmatpush.bf16.msra.mxu0 0
        %629 = vmatpush.bf16.msra.mxu0 0
        %630 = vmatpush.bf16.msra.mxu0 0
        %631 = vmatpush.bf16.msra.mxu0 0
        %632 = vmatpush.bf16.msra.mxu0 %v620
        %633 = vmatpush.bf16.msra.mxu0 %v619
        %634 = vmatpush.bf16.msra.mxu0 %v618
        %635 = vmatpush.bf16.msra.mxu0 %v617
        %636 = vmatmul.bf16.gmra.mxu0 %v626
        %v637 = vpop.f32.mrf.mxu0
        %v638 = vadd.f32 0.0, %v637
        %v639 = vpop.f32.mrf.mxu0
        %v640 = vadd.f32 0.0, %v639
        %641 = vdwg.mxu0
        %vm642 = vcmask 130048
        %643 = vst.msk [vmem:[#allocation5] sm:$0xff] %vm642, %v638
        %644 = vst.msk [vmem:[#allocation5 + $0x8] sm:$0xff] %vm642, %v640
        %v645 = vld [vmem:[%s7] sm:$0xf]
        %v646 = vld [vmem:[%s7 + $0x4] sm:$0xf]
        %v647 = vld [vmem:[%s7 + $0x8] sm:$0xf]
        %v648 = vld [vmem:[%s7 + $0xc] sm:$0xf]
        %v649 = vld [vmem:[%s7 + $0x10] sm:$0xf]
        %v650 = vld [vmem:[%s7 + $0x14] sm:$0xf]
        %v651 = vld [vmem:[%s7 + $0x18] sm:$0xf]
        %v652 = vld [vmem:[%s7 + $0x1c] sm:$0xf]
        %v661 = vunpack.c.l.b16 %v645
        %v662 = vunpack.c.l.b16 %v646
        %v663 = vunpack.c.l.b16 %v647
        %v664 = vunpack.c.l.b16 %v648
        %v665 = vunpack.c.l.b16 %v649
        %v666 = vunpack.c.l.b16 %v650
        %v667 = vunpack.c.l.b16 %v651
        %v668 = vunpack.c.l.b16 %v652
        %v669 = vpack.c.b16 %v662, %v661
        %v670 = vpack.c.b16 %v664, %v663
        %v671 = vpack.c.b16 %v666, %v665
        %v672 = vpack.c.b16 %v668, %v667
        %677 = vmatpush.bf16.msra.mxu0 0
        %678 = vmatpush.bf16.msra.mxu0 0
        %679 = vmatpush.bf16.msra.mxu0 0
        %680 = vmatpush.bf16.msra.mxu0 0
        %681 = vmatpush.bf16.msra.mxu0 %v672
        %682 = vmatpush.bf16.msra.mxu0 %v671
        %683 = vmatpush.bf16.msra.mxu0 %v670
        %684 = vmatpush.bf16.msra.mxu0 %v669
        %685 = vmatmul.bf16.gmra.mxu0 %v626
        %v686 = vpop.f32.mrf.mxu0
        %v687 = vadd.f32 0.0, %v686
        %v688 = vpop.f32.mrf.mxu0
        %v689 = vadd.f32 0.0, %v688
        %690 = vdwg.mxu0
        %691 = vst.msk [vmem:[#allocation6] sm:$0xff] %vm642, %v687
        %692 = vst.msk [vmem:[#allocation6 + $0x8] sm:$0xff] %vm642, %v689
        %v693 = vld [vmem:[%s5] sm:$0xff]
        %v694 = vld [vmem:[%s5 + $0x8] sm:$0xff]
        %v695 = vld [vmem:[%s5 + $0x10] sm:$0xff]
        %v696 = vld [vmem:[%s5 + $0x18] sm:$0xff]
        %v697 = vld [vmem:[%s5 + $0x20] sm:$0xff]
        %v698 = vld [vmem:[%s5 + $0x28] sm:$0xff]
        %v699 = vld [vmem:[%s5 + $0x30] sm:$0xff]
        %v700 = vld [vmem:[%s5 + $0x38] sm:$0xff]
        %v702 = vsel %vm589, %v587, 0
        %v705 = vsel %vm589, %v588, 0
        %707 = vmatpush.msra.mxu0 0.0
        %708 = vmatpush.msra.mxu0 0.0
        %709 = vmatpush.msra.mxu0 0.0
        %710 = vmatpush.msra.mxu0 0.0
        %711 = vmatpush.msra.mxu0 0.0
        %712 = vmatpush.msra.mxu0 0.0
        %713 = vmatpush.msra.mxu0 0.0
        %714 = vmatpush.msra.mxu0 0.0
        %715 = vmatpush.msra.mxu0 %v700
        %716 = vmatpush.msra.mxu0 %v699
        %717 = vmatpush.msra.mxu0 %v698
        %718 = vmatpush.msra.mxu0 %v697
        %719 = vmatpush.msra.mxu0 %v696
        %720 = vmatpush.msra.mxu0 %v695
        %721 = vmatpush.msra.mxu0 %v694
        %722 = vmatpush.msra.mxu0 %v693
        %723 = vmatmul.f32.gmra.mxu0 %v702
        %v724 = vpop.f32.mrf.mxu0
        %v725 = vadd.f32 0.0, %v724
        %726 = vmatmul.f32.gmra.mxu0 %v705
        %v727 = vpop.f32.mrf.mxu0
        %v728 = vadd.f32 0.0, %v727
        %729 = vdwg.mxu0
        %v730 = vld [vmem:[%s8] sm:$0x3]
        %v731 = vld [vmem:[%s9] sm:$0x1]
        %v733 = vperm.slane %v731, 0
        %v735 = vadd.f32 %v733, 0.0
        %737 = vset.pattern.permute.xlu0 0
        %738 = vperm.xlu0 %737, %v725
        %v739 = vpop.permute.xlu0 %738
        %742 = vset.pattern.permute.xlu0 0
        %743 = vperm.xlu0 %742, %v728
        %v744 = vpop.permute.xlu0 %743
        %v746 = vperm.slane %v730, 0
        %v747 = vmul.f32 %v739, %v746
        %v748 = vmul.f32 %v744, %v746
        %v749 = vadd.f32 %v735, %v747
        %v750 = vadd.f32 %v735, %v748
        %751 = vset.pattern.permute.xlu0 1
        %752 = vperm.xlu0 %751, %v725
        %v753 = vpop.permute.xlu0 %752
        %755 = vset.pattern.permute.xlu0 1
        %756 = vperm.xlu0 %755, %v728
        %v757 = vpop.permute.xlu0 %756
        %v759 = vperm.slane %v730, 1
        %v760 = vmul.f32 %v753, %v759
        %v761 = vmul.f32 %v757, %v759
        %v762 = vadd.f32 %v749, %v760
        %v763 = vadd.f32 %v750, %v761
        %v764 = vmax.f32 %v762, 0.0
        %v765 = vmax.f32 %v763, 0.0
        %vm766 = vcmp.ne.f32.partialorder %v762, %v762
        %vm767 = vcmp.ne.f32.partialorder %v763, %v763
        %v768 = vadd.f32 %v762, 0.0
        %v769 = vadd.f32 %v763, 0.0
        %v770 = vand.u32 2147483647, %v762
        %v771 = vand.u32 2147483647, %v763
        %v772 = vsub.f32 0.0, %v770
        %v773 = vsub.f32 0.0, %v771
        %v774 = vmul.f32 %v772, 1.442695
        %v775 = vpow.pop %v774
        %v776 = vmul.f32 %v773, 1.442695
        %v777 = vpow.pop %v776
        %v778 = vadd.f32 %v775, 1.0
        %v779 = vlog2.pop %v778
        %v780 = vmul.f32 %v779, 0.6931472
        %v781 = vmul.f32 -0.5, %v775
        %v782 = vadd.f32 %v781, 1.0
        %v783 = vmul.f32 %v782, %v775
        %v784 = vand.u32 2147483647, %v775
        %vm785 = vcmp.lt.f32.partialorder %v784, 0.0004427343
        %v786 = vsel %vm785, %v783, %v780
        %v787 = vadd.f32 %v777, 1.0
        %v788 = vlog2.pop %v787
        %v789 = vmul.f32 %v788, 0.6931472
        %v790 = vmul.f32 -0.5, %v777
        %v791 = vadd.f32 %v790, 1.0
        %v792 = vmul.f32 %v791, %v777
        %v793 = vand.u32 2147483647, %v777
        %vm794 = vcmp.lt.f32.partialorder %v793, 0.0004427343
        %v795 = vsel %vm794, %v792, %v789
        %v796 = vadd.f32 %v764, %v786
        %v797 = vadd.f32 %v765, %v795
        %v798 = vsel %vm766, %v768, %v796
        %v799 = vsel %vm767, %v769, %v797
        %800 = vst.msk [vmem:[#allocation3] sm:$0xff] %vm589, %v798
        %801 = vst.msk [vmem:[#allocation3 + $0x8] sm:$0xff] %vm589, %v799
        %v802 = vld [vmem:[%s10] sm:$0xff]
        %v803 = vld [vmem:[%s10 + $0x8] sm:$0xff]
        %v804 = vmul.f32 %v802, 1.442695
        %v805 = vpow.pop %v804
        %v806 = vmul.f32 %v803, 1.442695
        %v807 = vpow.pop %v806
        %v808 = vsub.f32 0.0, %v805
        %v809 = vsub.f32 0.0, %v807
        loop: start=0, step=1, limit=2
        $region73: #{tpu_custom_call.1} parent=71 // loop_pre_header
          _
        $region74: #{tpu_custom_call.1} parent=71 // loop_header
          %s811 = sphi 0, %s815
          %p812 = scmp.ge.s32.totalorder %s811, 2
          %v816 = vphi 0.0, %v1203
          %v817 = vphi 0.0, %v1204
        $region75: #{tpu_custom_call.1} parent=71 // loop_header_branch
          %814 = sbr.rel (%p812) target = $region79
        $region76: #{tpu_custom_call.1} parent=71 // loop_body
          %s818 = smul.u32 %s811, 8
          %s819 = scalar_lea.vmem [#allocation3], %s818
          %v820 = vld [vmem:[%s819] sm:$0xff]
          %s821 = scalar_lea.vmem [#allocation2], %s818
          %v822 = vld [vmem:[%s821] sm:$0xff]
          %v823 = vmul.f32 %v820, %v822
          %s824 = scalar_lea.vmem [#allocation5], %s818
          %v825 = vld [vmem:[%s824] sm:$0xff]
          %826 = vxpose.xlu0.b32.start [1/16] %v825, 128
          %827 = vxpose.xlu0.b32.cont [2/16] 0.0, 128
          %828 = vxpose.xlu0.b32.cont [3/16] 0.0, 128
          %829 = vxpose.xlu0.b32.cont [4/16] 0.0, 128
          %830 = vxpose.xlu0.b32.cont [5/16] 0.0, 128
          %831 = vxpose.xlu0.b32.cont [6/16] 0.0, 128
          %832 = vxpose.xlu0.b32.cont [7/16] 0.0, 128
          %833 = vxpose.xlu0.b32.cont [8/16] 0.0, 128
          %834 = vxpose.xlu0.b32.cont [9/16] 0.0, 128
          %835 = vxpose.xlu0.b32.cont [10/16] 0.0, 128
          %836 = vxpose.xlu0.b32.cont [11/16] 0.0, 128
          %837 = vxpose.xlu0.b32.cont [12/16] 0.0, 128
          %838 = vxpose.xlu0.b32.cont [13/16] 0.0, 128
          %839 = vxpose.xlu0.b32.cont [14/16] 0.0, 128
          %840 = vxpose.xlu0.b32.cont [15/16] 0.0, 128
          %841 = vxpose.xlu0.b32.end [16/16] 0.0, 128
          %v842 = vpop.trf.xlu0
          %v843 = vpop.trf.xlu0
          %v844 = vpop.trf.xlu0
          %v845 = vpop.trf.xlu0
          %v846 = vpop.trf.xlu0
          %v847 = vpop.trf.xlu0
          %v848 = vpop.trf.xlu0
          %v849 = vpop.trf.xlu0
          %v850 = vpop.trf.xlu0
          %v851 = vpop.trf.xlu0
          %v852 = vpop.trf.xlu0
          %v853 = vpop.trf.xlu0
          %v854 = vpop.trf.xlu0
          %v855 = vpop.trf.xlu0
          %v856 = vpop.trf.xlu0
          %v857 = vpop.trf.xlu0
          %s858 = scalar_lea.vmem [#allocation6], %s818
          %v859 = vld [vmem:[%s858] sm:$0xff]
          %860 = vxpose.xlu0.b32.start [1/16] %v859, 128
          %861 = vxpose.xlu0.b32.cont [2/16] 0.0, 128
          %862 = vxpose.xlu0.b32.cont [3/16] 0.0, 128
          %863 = vxpose.xlu0.b32.cont [4/16] 0.0, 128
          %864 = vxpose.xlu0.b32.cont [5/16] 0.0, 128
          %865 = vxpose.xlu0.b32.cont [6/16] 0.0, 128
          %866 = vxpose.xlu0.b32.cont [7/16] 0.0, 128
          %867 = vxpose.xlu0.b32.cont [8/16] 0.0, 128
          %868 = vxpose.xlu0.b32.cont [9/16] 0.0, 128
          %869 = vxpose.xlu0.b32.cont [10/16] 0.0, 128
          %870 = vxpose.xlu0.b32.cont [11/16] 0.0, 128
          %871 = vxpose.xlu0.b32.cont [12/16] 0.0, 128
          %872 = vxpose.xlu0.b32.cont [13/16] 0.0, 128
          %873 = vxpose.xlu0.b32.cont [14/16] 0.0, 128
          %874 = vxpose.xlu0.b32.cont [15/16] 0.0, 128
          %875 = vxpose.xlu0.b32.end [16/16] 0.0, 128
          %v876 = vpop.trf.xlu0
          %v877 = vpop.trf.xlu0
          %v878 = vpop.trf.xlu0
          %v879 = vpop.trf.xlu0
          %v880 = vpop.trf.xlu0
          %v881 = vpop.trf.xlu0
          %v882 = vpop.trf.xlu0
          %v883 = vpop.trf.xlu0
          %v884 = vpop.trf.xlu0
          %v885 = vpop.trf.xlu0
          %v886 = vpop.trf.xlu0
          %v887 = vpop.trf.xlu0
          %v888 = vpop.trf.xlu0
          %v889 = vpop.trf.xlu0
          %v890 = vpop.trf.xlu0
          %v891 = vpop.trf.xlu0
          %v892 = vperm.slane %v820, 0
          %v893 = vmul.f32 %v808, %v892
          %v894 = vmul.f32 %v809, %v892
          %v895 = vmul.f32 %v893, 1.442695
          %v896 = vpow.pop %v895
          %v897 = vmul.f32 %v894, 1.442695
          %v898 = vpow.pop %v897
          %v899 = vmul.f32 %v896, %v816
          %v900 = vmul.f32 %v898, %v817
          %902 = vset.pattern.permute.xlu0 0
          %903 = vperm.xlu0 %902, %v842
          %v904 = vpop.permute.xlu0 %903
          %907 = vset.pattern.permute.xlu0 0
          %908 = vperm.xlu0 %907, %v843
          %v909 = vpop.permute.xlu0 %908
          %v911 = vperm.slane %v823, 0
          %v912 = vmul.f32 %v904, %v911
          %v913 = vmul.f32 %v909, %v911
          %v914 = vadd.f32 %v899, %v912
          %v915 = vadd.f32 %v900, %v913
          %917 = vset.pattern.permute.xlu0 0
          %918 = vperm.xlu0 %917, %v876
          %v919 = vpop.permute.xlu0 %918
          %922 = vset.pattern.permute.xlu0 0
          %923 = vperm.xlu0 %922, %v877
          %v924 = vpop.permute.xlu0 %923
          %v926 = vmul.f32 %v919, %v914
          %v927 = vmul.f32 %v924, %v915
          %v928 = vsel %vm589, %v926, 0.0
          %v929 = vsel %vm589, %v927, 0.0
          %v930 = vadd.f32 %v928, %v929
          %v931 = vrot.slane %v930, 4
          %v932 = vadd.f32 %v930, %v931
          %v933 = vrot.slane %v932, 2
          %v934 = vadd.f32 %v932, %v933
          %v935 = vrot.slane %v934, 1
          %v936 = vadd.f32 %v934, %v935
          %v937 = vperm.slane %v820, 1
          %v938 = vmul.f32 %v808, %v937
          %v939 = vmul.f32 %v809, %v937
          %v940 = vmul.f32 %v938, 1.442695
          %v941 = vpow.pop %v940
          %v942 = vmul.f32 %v939, 1.442695
          %v943 = vpow.pop %v942
          %v944 = vmul.f32 %v941, %v914
          %v945 = vmul.f32 %v943, %v915
          %946 = vset.pattern.permute.xlu0 1
          %947 = vperm.xlu0 %946, %v842
          %v948 = vpop.permute.xlu0 %947
          %950 = vset.pattern.permute.xlu0 1
          %951 = vperm.xlu0 %950, %v843
          %v952 = vpop.permute.xlu0 %951
          %v954 = vperm.slane %v823, 1
          %v955 = vmul.f32 %v948, %v954
          %v956 = vmul.f32 %v952, %v954
          %v957 = vadd.f32 %v944, %v955
          %v958 = vadd.f32 %v945, %v956
          %959 = vset.pattern.permute.xlu0 1
          %960 = vperm.xlu0 %959, %v876
          %v961 = vpop.permute.xlu0 %960
          %963 = vset.pattern.permute.xlu0 1
          %964 = vperm.xlu0 %963, %v877
          %v965 = vpop.permute.xlu0 %964
          %v967 = vmul.f32 %v961, %v957
          %v968 = vmul.f32 %v965, %v958
          %v969 = vsel %vm589, %v967, 0.0
          %v970 = vsel %vm589, %v968, 0.0
          %v971 = vadd.f32 %v969, %v970
          %v972 = vrot.slane %v971, 4
          %v973 = vadd.f32 %v971, %v972
          %v974 = vrot.slane %v973, 2
          %v975 = vadd.f32 %v973, %v974
          %v976 = vrot.slane %v975, 1
          %v977 = vadd.f32 %v975, %v976
          %v978 = vperm.slane %v820, 2
          %v979 = vmul.f32 %v808, %v978
          %v980 = vmul.f32 %v809, %v978
          %v981 = vmul.f32 %v979, 1.442695
          %v982 = vpow.pop %v981
          %v983 = vmul.f32 %v980, 1.442695
          %v984 = vpow.pop %v983
          %v985 = vmul.f32 %v982, %v957
          %v986 = vmul.f32 %v984, %v958
          %987 = vset.pattern.permute.xlu0 2
          %988 = vperm.xlu0 %987, %v842
          %v989 = vpop.permute.xlu0 %988
          %991 = vset.pattern.permute.xlu0 2
          %992 = vperm.xlu0 %991, %v843
          %v993 = vpop.permute.xlu0 %992
          %v995 = vperm.slane %v823, 2
          %v996 = vmul.f32 %v989, %v995
          %v997 = vmul.f32 %v993, %v995
          %v998 = vadd.f32 %v985, %v996
          %v999 = vadd.f32 %v986, %v997
          %1000 = vset.pattern.permute.xlu0 2
          %1001 = vperm.xlu0 %1000, %v876
          %v1002 = vpop.permute.xlu0 %1001
          %1004 = vset.pattern.permute.xlu0 2
          %1005 = vperm.xlu0 %1004, %v877
          %v1006 = vpop.permute.xlu0 %1005
          %v1008 = vmul.f32 %v1002, %v998
          %v1009 = vmul.f32 %v1006, %v999
          %v1010 = vsel %vm589, %v1008, 0.0
          %v1011 = vsel %vm589, %v1009, 0.0
          %v1012 = vadd.f32 %v1010, %v1011
          %v1013 = vrot.slane %v1012, 4
          %v1014 = vadd.f32 %v1012, %v1013
          %v1015 = vrot.slane %v1014, 2
          %v1016 = vadd.f32 %v1014, %v1015
          %v1017 = vrot.slane %v1016, 1
          %v1018 = vadd.f32 %v1016, %v1017
          %v1019 = vperm.slane %v820, 3
          %v1020 = vmul.f32 %v808, %v1019
          %v1021 = vmul.f32 %v809, %v1019
          %v1022 = vmul.f32 %v1020, 1.442695
          %v1023 = vpow.pop %v1022
          %v1024 = vmul.f32 %v1021, 1.442695
          %v1025 = vpow.pop %v1024
          %v1026 = vmul.f32 %v1023, %v998
          %v1027 = vmul.f32 %v1025, %v999
          %1028 = vset.pattern.permute.xlu0 3
          %1029 = vperm.xlu0 %1028, %v842
          %v1030 = vpop.permute.xlu0 %1029
          %1032 = vset.pattern.permute.xlu0 3
          %1033 = vperm.xlu0 %1032, %v843
          %v1034 = vpop.permute.xlu0 %1033
          %v1036 = vperm.slane %v823, 3
          %v1037 = vmul.f32 %v1030, %v1036
          %v1038 = vmul.f32 %v1034, %v1036
          %v1039 = vadd.f32 %v1026, %v1037
          %v1040 = vadd.f32 %v1027, %v1038
          %1041 = vset.pattern.permute.xlu0 3
          %1042 = vperm.xlu0 %1041, %v876
          %v1043 = vpop.permute.xlu0 %1042
          %1045 = vset.pattern.permute.xlu0 3
          %1046 = vperm.xlu0 %1045, %v877
          %v1047 = vpop.permute.xlu0 %1046
          %v1049 = vmul.f32 %v1043, %v1039
          %v1050 = vmul.f32 %v1047, %v1040
          %v1051 = vsel %vm589, %v1049, 0.0
          %v1052 = vsel %vm589, %v1050, 0.0
          %v1053 = vadd.f32 %v1051, %v1052
          %v1054 = vrot.slane %v1053, 4
          %v1055 = vadd.f32 %v1053, %v1054
          %v1056 = vrot.slane %v1055, 2
          %v1057 = vadd.f32 %v1055, %v1056
          %v1058 = vrot.slane %v1057, 1
          %v1059 = vadd.f32 %v1057, %v1058
          %v1060 = vperm.slane %v820, 4
          %v1061 = vmul.f32 %v808, %v1060
          %v1062 = vmul.f32 %v809, %v1060
          %v1063 = vmul.f32 %v1061, 1.442695
          %v1064 = vpow.pop %v1063
          %v1065 = vmul.f32 %v1062, 1.442695
          %v1066 = vpow.pop %v1065
          %v1067 = vmul.f32 %v1064, %v1039
          %v1068 = vmul.f32 %v1066, %v1040
          %1069 = vset.pattern.permute.xlu0 4
          %1070 = vperm.xlu0 %1069, %v842
          %v1071 = vpop.permute.xlu0 %1070
          %1073 = vset.pattern.permute.xlu0 4
          %1074 = vperm.xlu0 %1073, %v843
          %v1075 = vpop.permute.xlu0 %1074
          %v1077 = vperm.slane %v823, 4
          %v1078 = vmul.f32 %v1071, %v1077
          %v1079 = vmul.f32 %v1075, %v1077
          %v1080 = vadd.f32 %v1067, %v1078
          %v1081 = vadd.f32 %v1068, %v1079
          %1082 = vset.pattern.permute.xlu0 4
          %1083 = vperm.xlu0 %1082, %v876
          %v1084 = vpop.permute.xlu0 %1083
          %1086 = vset.pattern.permute.xlu0 4
          %1087 = vperm.xlu0 %1086, %v877
          %v1088 = vpop.permute.xlu0 %1087
          %v1090 = vmul.f32 %v1084, %v1080
          %v1091 = vmul.f32 %v1088, %v1081
          %v1092 = vsel %vm589, %v1090, 0.0
          %v1093 = vsel %vm589, %v1091, 0.0
          %v1094 = vadd.f32 %v1092, %v1093
          %v1095 = vrot.slane %v1094, 4
          %v1096 = vadd.f32 %v1094, %v1095
          %v1097 = vrot.slane %v1096, 2
          %v1098 = vadd.f32 %v1096, %v1097
          %v1099 = vrot.slane %v1098, 1
          %v1100 = vadd.f32 %v1098, %v1099
          %v1101 = vperm.slane %v820, 5
          %v1102 = vmul.f32 %v808, %v1101
          %v1103 = vmul.f32 %v809, %v1101
          %v1104 = vmul.f32 %v1102, 1.442695
          %v1105 = vpow.pop %v1104
          %v1106 = vmul.f32 %v1103, 1.442695
          %v1107 = vpow.pop %v1106
          %v1108 = vmul.f32 %v1105, %v1080
          %v1109 = vmul.f32 %v1107, %v1081
          %1110 = vset.pattern.permute.xlu0 5
          %1111 = vperm.xlu0 %1110, %v842
          %v1112 = vpop.permute.xlu0 %1111
          %1114 = vset.pattern.permute.xlu0 5
          %1115 = vperm.xlu0 %1114, %v843
          %v1116 = vpop.permute.xlu0 %1115
          %v1118 = vperm.slane %v823, 5
          %v1119 = vmul.f32 %v1112, %v1118
          %v1120 = vmul.f32 %v1116, %v1118
          %v1121 = vadd.f32 %v1108, %v1119
          %v1122 = vadd.f32 %v1109, %v1120
          %1123 = vset.pattern.permute.xlu0 5
          %1124 = vperm.xlu0 %1123, %v876
          %v1125 = vpop.permute.xlu0 %1124
          %1127 = vset.pattern.permute.xlu0 5
          %1128 = vperm.xlu0 %1127, %v877
          %v1129 = vpop.permute.xlu0 %1128
          %v1131 = vmul.f32 %v1125, %v1121
          %v1132 = vmul.f32 %v1129, %v1122
          %v1133 = vsel %vm589, %v1131, 0.0
          %v1134 = vsel %vm589, %v1132, 0.0
          %v1135 = vadd.f32 %v1133, %v1134
          %v1136 = vrot.slane %v1135, 4
          %v1137 = vadd.f32 %v1135, %v1136
          %v1138 = vrot.slane %v1137, 2
          %v1139 = vadd.f32 %v1137, %v1138
          %v1140 = vrot.slane %v1139, 1
          %v1141 = vadd.f32 %v1139, %v1140
          %v1142 = vperm.slane %v820, 6
          %v1143 = vmul.f32 %v808, %v1142
          %v1144 = vmul.f32 %v809, %v1142
          %v1145 = vmul.f32 %v1143, 1.442695
          %v1146 = vpow.pop %v1145
          %v1147 = vmul.f32 %v1144, 1.442695
          %v1148 = vpow.pop %v1147
          %v1149 = vmul.f32 %v1146, %v1121
          %v1150 = vmul.f32 %v1148, %v1122
          %1151 = vset.pattern.permute.xlu0 6
          %1152 = vperm.xlu0 %1151, %v842
          %v1153 = vpop.permute.xlu0 %1152
          %1155 = vset.pattern.permute.xlu0 6
          %1156 = vperm.xlu0 %1155, %v843
          %v1157 = vpop.permute.xlu0 %1156
          %v1159 = vperm.slane %v823, 6
          %v1160 = vmul.f32 %v1153, %v1159
          %v1161 = vmul.f32 %v1157, %v1159
          %v1162 = vadd.f32 %v1149, %v1160
          %v1163 = vadd.f32 %v1150, %v1161
          %1164 = vset.pattern.permute.xlu0 6
          %1165 = vperm.xlu0 %1164, %v876
          %v1166 = vpop.permute.xlu0 %1165
          %1168 = vset.pattern.permute.xlu0 6
          %1169 = vperm.xlu0 %1168, %v877
          %v1170 = vpop.permute.xlu0 %1169
          %v1172 = vmul.f32 %v1166, %v1162
          %v1173 = vmul.f32 %v1170, %v1163
          %v1174 = vsel %vm589, %v1172, 0.0
          %v1175 = vsel %vm589, %v1173, 0.0
          %v1176 = vadd.f32 %v1174, %v1175
          %v1177 = vrot.slane %v1176, 4
          %v1178 = vadd.f32 %v1176, %v1177
          %v1179 = vrot.slane %v1178, 2
          %v1180 = vadd.f32 %v1178, %v1179
          %v1181 = vrot.slane %v1180, 1
          %v1182 = vadd.f32 %v1180, %v1181
          %v1183 = vperm.slane %v820, 7
          %v1184 = vmul.f32 %v808, %v1183
          %v1185 = vmul.f32 %v809, %v1183
          %v1186 = vmul.f32 %v1184, 1.442695
          %v1187 = vpow.pop %v1186
          %v1188 = vmul.f32 %v1185, 1.442695
          %v1189 = vpow.pop %v1188
          %v1190 = vmul.f32 %v1187, %v1162
          %v1191 = vmul.f32 %v1189, %v1163
          %1192 = vset.pattern.permute.xlu0 7
          %1193 = vperm.xlu0 %1192, %v842
          %v1194 = vpop.permute.xlu0 %1193
          %1196 = vset.pattern.permute.xlu0 7
          %1197 = vperm.xlu0 %1196, %v843
          %v1198 = vpop.permute.xlu0 %1197
          %v1200 = vperm.slane %v823, 7
          %v1201 = vmul.f32 %v1194, %v1200
          %v1202 = vmul.f32 %v1198, %v1200
          %v1203 = vadd.f32 %v1190, %v1201
          %v1204 = vadd.f32 %v1191, %v1202
          %1205 = vset.pattern.permute.xlu0 7
          %1206 = vperm.xlu0 %1205, %v876
          %v1207 = vpop.permute.xlu0 %1206
          %1209 = vset.pattern.permute.xlu0 7
          %1210 = vperm.xlu0 %1209, %v877
          %v1211 = vpop.permute.xlu0 %1210
          %v1213 = vmul.f32 %v1207, %v1203
          %v1214 = vmul.f32 %v1211, %v1204
          %v1215 = vsel %vm589, %v1213, 0.0
          %v1216 = vsel %vm589, %v1214, 0.0
          %v1217 = vadd.f32 %v1215, %v1216
          %v1218 = vrot.slane %v1217, 4
          %v1219 = vadd.f32 %v1217, %v1218
          %v1220 = vrot.slane %v1219, 2
          %v1221 = vadd.f32 %v1219, %v1220
          %v1222 = vrot.slane %v1221, 1
          %v1223 = vadd.f32 %v1221, %v1222
          %vm1224 = vcmask 1040384
          %v1225 = vsel %vm1224, %v936, %v977
          %vm1226 = vcmask 1041408
          %v1227 = vsel %vm1226, %v1225, %v1018
          %vm1228 = vcmask 1042432
          %v1229 = vsel %vm1228, %v1227, %v1059
          %vm1230 = vcmask 1043456
          %v1231 = vsel %vm1230, %v1229, %v1100
          %vm1232 = vcmask 1044480
          %v1233 = vsel %vm1232, %v1231, %v1141
          %vm1234 = vcmask 1045504
          %v1235 = vsel %vm1234, %v1233, %v1182
          %vm1236 = vcmask 1046528
          %v1237 = vsel %vm1236, %v1235, %v1223
          %s1238 = scalar_lea.vmem [#allocation4], %s818
          %1239 = vst.msk [vmem:[%s1238] sm:$0xff] %vm589, %v1237
        $region77: #{tpu_custom_call.1} parent=71 // loop_footer
          %s815 = sadd.s32 1, %s811
        $region78: #{tpu_custom_call.1} parent=71 // loop_footer_branch
          %810 = sbr.rel target = $region74
        $region79: #{tpu_custom_call.1} parent=71 // loop_exit
          _
        %v1240 = vld [vmem:[%s438] sm:$0xf]
        %v1241 = vld [vmem:[%s438 + $0x4] sm:$0xf]
        %v1242 = vld [vmem:[%s2] sm:$0xf]
        %v1243 = vld [vmem:[%s2 + $0x4] sm:$0xf]
        %v1244 = vld [vmem:[%s2 + $0x8] sm:$0xf]
        %v1245 = vld [vmem:[%s2 + $0xc] sm:$0xf]
        %v1248 = vunpack.c.l.b16 %v1240
        %v1249 = vunpack.c.l.b16 %v1241
        %v1250 = vpack.c.b16 %v1249, %v1248
        %v1255 = vunpack.c.l.b16 %v1242
        %v1256 = vunpack.c.l.b16 %v1243
        %v1257 = vunpack.c.l.b16 %v1244
        %v1258 = vunpack.c.l.b16 %v1245
        %v1259 = vpack.c.b16 %v1256, %v1255
        %v1260 = vpack.c.b16 %v1258, %v1257
        %v1264 = vsel %vm463, %v1250, 0
        %1266 = vmatpush.bf16.msra.mxu0 0
        %1267 = vmatpush.bf16.msra.mxu0 0
        %1268 = vmatpush.bf16.msra.mxu0 0
        %1269 = vmatpush.bf16.msra.mxu0 0
        %1270 = vmatpush.bf16.msra.mxu0 0
        %1271 = vmatpush.bf16.msra.mxu0 0
        %1272 = vmatpush.bf16.msra.mxu0 %v1260
        %1273 = vmatpush.bf16.msra.mxu0 %v1259
        %1274 = vmatmul.bf16.gmra.mxu0 %v1264
        %v1275 = vpop.f32.mrf.mxu0
        %v1276 = vadd.f32 0.0, %v1275
        %v1277 = vpop.f32.mrf.mxu0
        %v1278 = vadd.f32 0.0, %v1277
        %1279 = vdwg.mxu0
        %v1280 = vld [vmem:[#allocation4] sm:$0xff]
        %v1281 = vld [vmem:[#allocation4 + $0x8] sm:$0xff]
        %v1282 = vld [vmem:[%s11] sm:$0x1]
        %v1283 = vld [vmem:[#allocation2] sm:$0xff]
        %v1284 = vld [vmem:[#allocation2 + $0x8] sm:$0xff]
        %v1286 = vperm.slane %v1282, 0
        %v1288 = vmul.f32 %v1286, %v1283
        %v1289 = vmul.f32 %v1286, %v1284
        %v1290 = vadd.f32 %v1280, %v1288
        %v1291 = vadd.f32 %v1281, %v1289
        %v1292 = vxor.u32 %v1276, 2147483648
        %v1293 = vxor.u32 %v1278, 2147483648
        %v1294 = vmul.f32 %v1292, 1.442695
        %v1295 = vpow.pop %v1294
        %v1296 = vmul.f32 %v1293, 1.442695
        %v1297 = vpow.pop %v1296
        %v1298 = vadd.f32 %v1295, 1.0
        %v1299 = vadd.f32 %v1297, 1.0
        %v1300 = vrcp.pop %v1298
        %v1301 = vmul.f32 %v1298, %v1300
        %v1302 = vsub.f32 1.0, %v1301
        %v1303 = vmul.f32 %v1300, %v1302
        %v1304 = vadd.f32 %v1300, %v1303
        %vm1305 = vweird.f32 %v1298
        %vm1306 = vweird.f32 %v1300
        %vm1307 = vmor %vm1305, %vm1306
        %v1308 = vsel %vm1307, %v1300, %v1304
        %v1309 = vand.u32 2147483647, %v1298
        %vm1310 = vcmp.eq.f32.partialorder %v1309, 8.507059e+37
        %v1311 = vand.u32 %v1298, 2147483648
        %v1312 = vor.u32 1.1754944e-38, %v1311
        %v1313 = vsel %vm1310, %v1312, %v1308
        %v1314 = vmul.f32 1.0, %v1313
        %v1315 = vrcp.pop %v1299
        %v1316 = vmul.f32 %v1299, %v1315
        %v1317 = vsub.f32 1.0, %v1316
        %v1318 = vmul.f32 %v1315, %v1317
        %v1319 = vadd.f32 %v1315, %v1318
        %vm1320 = vweird.f32 %v1299
        %vm1321 = vweird.f32 %v1315
        %vm1322 = vmor %vm1320, %vm1321
        %v1323 = vsel %vm1322, %v1315, %v1319
        %v1324 = vand.u32 2147483647, %v1299
        %vm1325 = vcmp.eq.f32.partialorder %v1324, 8.507059e+37
        %v1326 = vand.u32 %v1299, 2147483648
        %v1327 = vor.u32 1.1754944e-38, %v1326
        %v1328 = vsel %vm1325, %v1327, %v1323
        %v1329 = vmul.f32 1.0, %v1328
        %v1330 = vmul.f32 %v1276, %v1314
        %v1331 = vmul.f32 %v1278, %v1329
        %v1332 = vmul.f32 %v1290, %v1330
        %v1333 = vmul.f32 %v1291, %v1331
        %v1334 = vpack.c.bf16 %v1333, %v1332
        %v1335 = vld [vmem:[%s12] sm:$0xf]
        %v1336 = vld [vmem:[%s12 + $0x4] sm:$0xf]
        %v1337 = vld [vmem:[%s12 + $0x8] sm:$0xf]
        %v1338 = vld [vmem:[%s12 + $0xc] sm:$0xf]
        %v1339 = vld [vmem:[%s12 + $0x10] sm:$0xf]
        %v1340 = vld [vmem:[%s12 + $0x14] sm:$0xf]
        %v1341 = vld [vmem:[%s12 + $0x18] sm:$0xf]
        %v1342 = vld [vmem:[%s12 + $0x1c] sm:$0xf]
        %v1351 = vunpack.c.l.b16 %v1335
        %v1352 = vunpack.c.l.b16 %v1336
        %v1353 = vunpack.c.l.b16 %v1337
        %v1354 = vunpack.c.l.b16 %v1338
        %v1355 = vunpack.c.l.b16 %v1339
        %v1356 = vunpack.c.l.b16 %v1340
        %v1357 = vunpack.c.l.b16 %v1341
        %v1358 = vunpack.c.l.b16 %v1342
        %v1359 = vpack.c.b16 %v1352, %v1351
        %v1360 = vpack.c.b16 %v1354, %v1353
        %v1361 = vpack.c.b16 %v1356, %v1355
        %v1362 = vpack.c.b16 %v1358, %v1357
        %v1368 = vsel %vm589, %v1334, 0
        %1370 = vmatpush.bf16.msra.mxu0 0
        %1371 = vmatpush.bf16.msra.mxu0 0
        %1372 = vmatpush.bf16.msra.mxu0 0
        %1373 = vmatpush.bf16.msra.mxu0 0
        %1374 = vmatpush.bf16.msra.mxu0 %v1362
        %1375 = vmatpush.bf16.msra.mxu0 %v1361
        %1376 = vmatpush.bf16.msra.mxu0 %v1360
        %1377 = vmatpush.bf16.msra.mxu0 %v1359
        %1378 = vmatmul.bf16.gmra.mxu0 %v1368
        %v1379 = vpop.f32.mrf.mxu0
        %v1380 = vadd.f32 0.0, %v1379
        %v1381 = vpop.f32.mrf.mxu0
        %v1382 = vadd.f32 0.0, %v1381
        %1383 = vdwg.mxu0
        %1384 = vst [vmem:[%s433] sm:$0xff] %v1380
        %1385 = vst [vmem:[%s433 + $0x8] sm:$0xff] %v1382
        %s1386 = sand.u32 %s313, 1
        %s1387 = scalar_lea.sflag [#allocation8], %s1386
        %s1388 = sand.u32 %s313, 1
        %s1389 = smul.addr %s1388, 16
        %s1390 = scalar_lea.vmem [#allocation7], %s1389
        // Predicated region
        $region80: #{tpu_custom_call.1} parent=71 // pred_check
          %p1391 = pneg %p323
        $region81: #{tpu_custom_call.1} parent=71 // pred_check_branch
          %1393 = sbr.rel (%p1391) target = $region83
        $region82: #{tpu_custom_call.1} parent=71 // pred_region
          %1395 = vsyncadd %s1387, 0
          %s1396 = smul.addr %s27, 2
          %s1397 = smul.addr %s1396, 8
          %s1398 = scalar_lea.hbm %s13, %s1397
          %s1399 = sshll.u32 %s1390, 4
          %s1400 = int_to_ptr.vmem [resolvable:$true] %s1399
          %s1401 = sshll.u32 %s1398, 4
          %s1402 = int_to_ptr.hbm [resolvable:$true] %s1401
          %1407 = dma.vmem_to_hbm [thread:$0]  %s1400, 256, %s1402, %s1387, 128, 128, 8
        $region83: #{tpu_custom_call.1} parent=71 // pred_fallthru
          _
      $region72: #{tpu_custom_call.1} parent=5 // pred_fallthru
        _
      %p1408 = scmp.le.s32.totalorder 2, %s22
      // Predicated region
      $region84: #{tpu_custom_call.1} parent=5 // pred_check
        %p1409 = pneg %p1408
      $region85: #{tpu_custom_call.1} parent=5 // pred_check_branch
        %1411 = sbr.rel (%p1409) target = $region87
      $region86: #{tpu_custom_call.1} parent=5 // pred_region
        %s1412 = ssub.s32 %s22, 2
        // Predicated region
        $region88: #{tpu_custom_call.1} parent=86 // pred_check
          %p1413 = pneg %p329
        $region89: #{tpu_custom_call.1} parent=86 // pred_check_branch
          %1415 = sbr.rel (%p1413) target = $region91
        $region90: #{tpu_custom_call.1} parent=86 // pred_region
          %s1416 = sand.u32 %s314, 1
          %s1417 = scalar_lea.sflag [#allocation8], %s1416
          %s1418 = sand.u32 %s314, 1
          %s1419 = smul.addr %s1418, 16
          %s1420 = scalar_lea.vmem [#allocation7], %s1419
          %1422 = dma.done %s1417, 256
        $region91: #{tpu_custom_call.1} parent=86 // pred_fallthru
          _
      $region87: #{tpu_custom_call.1} parent=5 // pred_fallthru
        _
    $region6: #{tpu_custom_call.1} parent=1 // loop_footer
      %s26 = sadd.s32 1, %s22
    $region7: #{tpu_custom_call.1} parent=1 // loop_footer_branch
      %21 = sbr.rel target = $region3
    $region8: #{tpu_custom_call.1} parent=1 // loop_exit
      _
    %1423 = vsyncpa [#allocation8], 1
    %s1424 = scalar_lea.sflag [#allocation8], 1
    %1425 = vsyncpa %s1424, 1

</llo_original>
